<compile_context>
chip_gen: v5e
topology: v5e:2x2
jax: 0.10.0
libtpu: 0.0.40
codegen_flags: <defaults>
</compile_context>

<pallas_src>
import functools

import jax
import jax.numpy as jnp
from jax.experimental import pallas as pl
from jax.experimental.pallas import tpu as pltpu

LANES = 128


def _round_up(x, m):
    return (x + m - 1) // m * m


def _pad_last(x, target):
    pad = target - x.shape[-1]
    if pad == 0:
        return x
    return jnp.pad(x, [(0, 0)] * (x.ndim - 1) + [(0, pad)])


# ---------------------------------------------------------------------------
# Kernel 1: 1x1 conv (matmul) + folded-BN bias + optional ReLU
# ---------------------------------------------------------------------------
def _pw_conv_kernel(x_ref, w_ref, b_ref, o_ref, *, relu):
    x = x_ref[...].astype(jnp.bfloat16)            # bf16 MXU operands,
    w = w_ref[...].astype(jnp.bfloat16)            # f32 accumulate
    y = jnp.dot(x, w, preferred_element_type=jnp.float32)
    y = y + b_ref[...]                             # folded BatchNorm bias
    if relu:
        y = jnp.maximum(y, 0.0)
    o_ref[...] = y.astype(o_ref.dtype)


def pointwise_conv_bn_act(x_nhwc, w_pad, bias_pad, *, relu, tm=512):
    """x_nhwc: (B,H,W,Kp) channel-padded. w_pad: (Kp,Np). bias_pad: (1,Np). -> (B,H,W,Np)."""
    B, H, W, Kp = x_nhwc.shape
    Np = w_pad.shape[1]
    M = B * H * W
    x_rows = x_nhwc.reshape(M, Kp)
    tm_eff = min(tm, M)
    grid = (pl.cdiv(M, tm_eff),)
    out = pl.pallas_call(
        functools.partial(_pw_conv_kernel, relu=relu),
        out_shape=jax.ShapeDtypeStruct((M, Np), jnp.float32),
        grid_spec=pltpu.PrefetchScalarGridSpec(
            num_scalar_prefetch=0,
            grid=grid,
            in_specs=[
                pl.BlockSpec((tm_eff, Kp), lambda i: (i, 0)),   # M-tiled activations
                pl.BlockSpec((Kp, Np), lambda i: (0, 0)),       # resident weights
                pl.BlockSpec((1, Np), lambda i: (0, 0)),        # resident bias
            ],
            out_specs=pl.BlockSpec((tm_eff, Np), lambda i: (i, 0)),
        ),
        compiler_params=pltpu.CompilerParams(dimension_semantics=("parallel",)),
    )(x_rows, w_pad, bias_pad)
    return out.reshape(B, H, W, Np)


# ---------------------------------------------------------------------------
# Kernel 2: 3x3 depthwise conv (pad=1, stride 1|2) + folded BN (no activation)
# ---------------------------------------------------------------------------
def _dw_conv_kernel(x_ref, w_ref, b_ref, o_ref, *, taps, h_out, w_out):
    c = x_ref.shape[-1]
    acc = jnp.zeros((h_out, w_out, c), jnp.float32)
    for k, (r0, c0) in enumerate(taps):                         # static 3x3 tap unroll
        xs = x_ref[0, r0:r0 + h_out, c0:c0 + w_out, :]          # contiguous Ref window
        acc = acc + xs * w_ref[k:k + 1, :]                      # per-channel (lane) weight
    o_ref[0] = (acc + b_ref[...]).astype(o_ref.dtype)


def depthwise3x3_bn(x_nhwc, w9c, bias, *, stride):
    """x_nhwc: (B,H,W,C) channel-padded. w9c: (9,C) folded taps. bias: (1,C)."""
    B, H, W, C = x_nhwc.shape
    xp = jnp.pad(x_nhwc, ((0, 0), (1, 1), (1, 1), (0, 0)))
    if stride == 1:
        h_out, w_out = H, W
        planes = xp                                             # (B, H+2, W+2, C)
        taps = [(dy, dx) for dy in range(3) for dx in range(3)]
    elif stride == 2:
        assert H % 2 == 0 and W % 2 == 0
        h_out, w_out = H // 2, W // 2
        hp = h_out + 1
        # phase (space-to-depth) split: tap (dy,dx) of the strided conv becomes a
        # contiguous window of phase plane (dy%2, dx%2), stacked along rows.
        planes = jnp.concatenate(
            [xp[:, py::2, px::2, :] for py in range(2) for px in range(2)], axis=1)
        taps = [(((dy % 2) * 2 + dx % 2) * hp + dy // 2, dx // 2)
                for dy in range(3) for dx in range(3)]
    else:
        # TODO(synk): stride=3 (allowed by the module signature, unused in yolov5 configs).
        raise NotImplementedError("stride must be 1 or 2")
    R, Wp = planes.shape[1], planes.shape[2]
    # TODO(synk): add a halo-tiled spatial grid axis for very large H*W; here a full
    # per-batch (R, Wp, C) plane is assumed to fit comfortably in VMEM.
    return pl.pallas_call(
        functools.partial(_dw_conv_kernel, taps=taps, h_out=h_out, w_out=w_out),
        out_shape=jax.ShapeDtypeStruct((B, h_out, w_out, C), jnp.float32),
        grid_spec=pltpu.PrefetchScalarGridSpec(
            num_scalar_prefetch=0,
            grid=(B,),
            in_specs=[
                pl.BlockSpec((1, R, Wp, C), lambda b: (b, 0, 0, 0)),
                pl.BlockSpec((9, C), lambda b: (0, 0)),
                pl.BlockSpec((1, C), lambda b: (0, 0)),
            ],
            out_specs=pl.BlockSpec((1, h_out, w_out, C), lambda b: (b, 0, 0, 0)),
        ),
        compiler_params=pltpu.CompilerParams(dimension_semantics=("parallel",)),
    )(planes, w9c, bias)


# ---------------------------------------------------------------------------
# Parameter folding (eval-mode BN folded into weights / bias) + padding
# ---------------------------------------------------------------------------
def _fold_bn(gamma, beta, mean, var, eps=1e-5):
    scale = gamma * jax.lax.rsqrt(var + eps)
    return scale, beta - mean * scale


def _prep_pointwise(w, bn, k_pad, n_pad):
    """torch (Cout,Cin,1,1) conv weight + BN -> (k_pad,n_pad) matrix, (1,n_pad) bias."""
    cout, cin = w.shape[0], w.shape[1]
    scale, bias = _fold_bn(**bn)
    wm = w.reshape(cout, cin).T * scale[None, :]                # fold BN scale into columns
    wm = jnp.zeros((k_pad, n_pad), jnp.float32).at[:cin, :cout].set(wm)
    bm = jnp.zeros((1, n_pad), jnp.float32).at[0, :cout].set(bias)
    return wm, bm


def _prep_depthwise(w, bn, c_pad):
    """torch (C,1,3,3) depthwise weight + BN -> (9,c_pad) taps, (1,c_pad) bias."""
    c = w.shape[0]
    scale, bias = _fold_bn(**bn)
    wm = w.reshape(c, 9).T * scale[None, :]
    wm = jnp.zeros((9, c_pad), jnp.float32).at[:, :c].set(wm)
    bm = jnp.zeros((1, c_pad), jnp.float32).at[0, :c].set(bias)
    return wm, bm


# ---------------------------------------------------------------------------
# Shuffle_Block forward (NCHW in / NCHW out, matching the PyTorch module)
# ---------------------------------------------------------------------------
def shuffle_block_forward(x_nchw, params, *, stride, tm=512):
    B, c_in, H, W = x_nchw.shape
    bf = params["b2_pw2_w"].shape[0]                            # branch_features = oup // 2
    cp = _round_up(max(c_in, bf), LANES)                        # lane-dense channel width
    x = jnp.transpose(x_nchw, (0, 2, 3, 1))                     # NCHW -> NHWC

    if stride == 1:
        a = x[..., :bf]                                         # x1 passthrough half
        xin = _pad_last(x[..., bf:], cp)                        # x2 -> branch2
    else:
        xin = _pad_last(x, cp)
        # branch1: depthwise3x3(stride) + BN  ->  1x1 + BN + ReLU
        wd, bd = _prep_depthwise(params["b1_dw_w"], params["b1_dw_bn"], cp)
        g = depthwise3x3_bn(xin, wd, bd, stride=stride)
        wp, bp = _prep_pointwise(params["b1_pw_w"], params["b1_pw_bn"], cp, cp)
        a = pointwise_conv_bn_act(g, wp, bp, relu=True, tm=tm)[..., :bf]

    # branch2: 1x1+BN+ReLU -> depthwise3x3(stride)+BN -> 1x1+BN+ReLU
    w1, b1 = _prep_pointwise(params["b2_pw1_w"], params["b2_pw1_bn"], cp, cp)
    h = pointwise_conv_bn_act(xin, w1, b1, relu=True, tm=tm)
    wd2, bd2 = _prep_depthwise(params["b2_dw_w"], params["b2_dw_bn"], cp)
    h = depthwise3x3_bn(h, wd2, bd2, stride=stride)
    w2, b2 = _prep_pointwise(params["b2_pw2_w"], params["b2_pw2_bn"], cp, cp)
    bout = pointwise_conv_bn_act(h, w2, b2, relu=True, tm=tm)[..., :bf]

    # concat(a, bout) followed by channel_shuffle(groups=2) == channel interleave
    # [a0, b0, a1, b1, ...]  (pure index plumbing -> XLA)
    ho, wo = a.shape[1], a.shape[2]
    out = jnp.stack([a, bout], axis=-1).reshape(B, ho, wo, 2 * bf)
    return jnp.transpose(out, (0, 3, 1, 2))                     # NHWC -> NCHW


# ---------------------------------------------------------------------------
# Pure-JAX reference (mirrors the PyTorch module) + parameter init
# ---------------------------------------------------------------------------
def _conv_ref(x, w, stride=1, padding=0, groups=1):
    return jax.lax.conv_general_dilated(
        x, w, window_strides=(stride, stride),
        padding=[(padding, padding), (padding, padding)],
        dimension_numbers=("NCHW", "OIHW", "NCHW"),
        feature_group_count=groups)


def _bn_ref(y, bn, eps=1e-5):
    scale = bn["gamma"] / jnp.sqrt(bn["var"] + eps)
    bias = bn["beta"] - bn["mean"] * scale
    return y * scale[None, :, None, None] + bias[None, :, None, None]


def shuffle_block_ref(x, p, stride):
    bf = p["b2_pw2_w"].shape[0]

    def branch2(z):
        y = jax.nn.relu(_bn_ref(_conv_ref(z, p["b2_pw1_w"]), p["b2_pw1_bn"]))
        y = _bn_ref(_conv_ref(y, p["b2_dw_w"], stride=stride, padding=1, groups=bf),
                    p["b2_dw_bn"])
        return jax.nn.relu(_bn_ref(_conv_ref(y, p["b2_pw2_w"]), p["b2_pw2_bn"]))

    if stride == 1:
        x1, x2 = x[:, :bf], x[:, bf:]
        out = jnp.concatenate([x1, branch2(x2)], axis=1)
    else:
        inp = x.shape[1]
        y1 = _bn_ref(_conv_ref(x, p["b1_dw_w"], stride=stride, padding=1, groups=inp),
                     p["b1_dw_bn"])
        y1 = jax.nn.relu(_bn_ref(_conv_ref(y1, p["b1_pw_w"]), p["b1_pw_bn"]))
        out = jnp.concatenate([y1, branch2(x)], axis=1)
    b, c, h, w = out.shape
    return out.reshape(b, 2, c // 2, h, w).transpose(0, 2, 1, 3, 4).reshape(b, c, h, w)


def init_shuffle_block_params(key, inp, oup, stride):
    bf = oup // 2
    assert stride != 1 or inp == bf * 2
    cin2 = inp if stride > 1 else bf
    keys = iter(jax.random.split(key, 32))

    def bn(c):
        return {"gamma": 1.0 + 0.1 * jax.random.normal(next(keys), (c,), jnp.float32),
                "beta": 0.1 * jax.random.normal(next(keys), (c,), jnp.float32),
                "mean": 0.1 * jax.random.normal(next(keys), (c,), jnp.float32),
                "var": 1.0 + 0.1 * jnp.abs(jax.random.normal(next(keys), (c,), jnp.float32))}

    p = {}
    if stride > 1:
        p["b1_dw_w"] = 0.3 * jax.random.normal(next(keys), (inp, 1, 3, 3), jnp.float32)
        p["b1_dw_bn"] = bn(inp)
        p["b1_pw_w"] = 0.3 * jax.random.normal(next(keys), (bf, inp, 1, 1), jnp.float32)
        p["b1_pw_bn"] = bn(bf)
    p["b2_pw1_w"] = 0.3 * jax.random.normal(next(keys), (bf, cin2, 1, 1), jnp.float32)
    p["b2_pw1_bn"] = bn(bf)
    p["b2_dw_w"] = 0.3 * jax.random.normal(next(keys), (bf, 1, 3, 3), jnp.float32)
    p["b2_dw_bn"] = bn(bf)
    p["b2_pw2_w"] = 0.3 * jax.random.normal(next(keys), (bf, bf, 1, 1), jnp.float32)
    p["b2_pw2_bn"] = bn(bf)
    return p


if __name__ == "__main__":
    key = jax.random.PRNGKey(0)
    k1, k2, k3 = jax.random.split(key, 3)

    B, H, W = 2, 16, 16
    inp1, oup1 = 16, 16          # stride=1 block (channel-split path)
    inp2, oup2 = 16, 32          # stride=2 block (both branches, downsample)

    x = jax.random.normal(k1, (B, inp1, H, W), jnp.float32)
    p1 = init_shuffle_block_params(k2, inp1, oup1, stride=1)
    p2 = init_shuffle_block_params(k3, inp2, oup2, stride=2)

    fwd1 = jax.jit(functools.partial(shuffle_block_forward, stride=1))
    fwd2 = jax.jit(functools.partial(shuffle_block_forward, stride=2))

    o1 = jax.block_until_ready(fwd1(x, p1))
    o2 = jax.block_until_ready(fwd2(x, p2))
    assert o1.shape == (B, oup1, H, W), o1.shape
    assert o2.shape == (B, oup2, H // 2, W // 2), o2.shape

    r1 = shuffle_block_ref(x, p1, 1)
    r2 = shuffle_block_ref(x, p2, 2)
    assert jnp.allclose(o1, r1, atol=5e-2, rtol=5e-2), float(jnp.max(jnp.abs(o1 - r1)))
    assert jnp.allclose(o2, r2, atol=5e-2, rtol=5e-2), float(jnp.max(jnp.abs(o2 - r2)))
    print("KERNEL_OK")
</pallas_src>

<mosaic_0001>
module attributes {stable_mosaic.version = 11 : i64} {
  func.func @_pw_conv_kernel(%arg0: i32, %arg1: memref<512x128xf32, #tpu.memory_space<vmem>>, %arg2: memref<128x128xf32, #tpu.memory_space<vmem>>, %arg3: memref<1x128xf32, #tpu.memory_space<vmem>>, %arg4: memref<512x128xf32, #tpu.memory_space<vmem>>) attributes {dimension_semantics = [#tpu.dimension_semantics<parallel>], iteration_bounds = array<i64: 1>, scalar_prefetch = 0 : i64, scratch_operands = 0 : i64, tpu.core_type = #tpu.core_type<tc>, window_params = [{transform_indices = @transform_0, window_bounds = array<i64: 512, 128>}, {pipeline_mode = #tpu.pipeline_mode<synchronous>, transform_indices = @transform_1, window_bounds = array<i64: 128, 128>}, {pipeline_mode = #tpu.pipeline_mode<synchronous>, transform_indices = @transform_2, window_bounds = array<i64: 1, 128>}, {transform_indices = @transform_3, window_bounds = array<i64: 512, 128>}]} {
    %c0 = arith.constant 0 : index
    %c0_0 = arith.constant 0 : index
    %0 = vector.load %arg1[%c0, %c0_0] : memref<512x128xf32, #tpu.memory_space<vmem>>, vector<512x128xf32>
    %1 = arith.truncf %0 : vector<512x128xf32> to vector<512x128xbf16>
    %c0_1 = arith.constant 0 : index
    %c0_2 = arith.constant 0 : index
    %2 = vector.load %arg2[%c0_1, %c0_2] : memref<128x128xf32, #tpu.memory_space<vmem>>, vector<128x128xf32>
    %3 = arith.truncf %2 : vector<128x128xf32> to vector<128x128xbf16>
    %cst = arith.constant dense<0.000000e+00> : vector<512x128xf32>
    %4 = tpu.matmul %1, %3, %cst {dimension_numbers = #tpu.dot_dimension_numbers<[1], [0], [0], [1], [0, 0, 1, 1], [], []>} : vector<512x128xbf16>, vector<128x128xbf16>, vector<512x128xf32> -> vector<512x128xf32>
    %c0_3 = arith.constant 0 : index
    %c0_4 = arith.constant 0 : index
    %5 = vector.load %arg3[%c0_3, %c0_4] : memref<1x128xf32, #tpu.memory_space<vmem>>, vector<1x128xf32>
    %6 = vector.broadcast %5 : vector<1x128xf32> to vector<512x128xf32>
    %7 = arith.addf %4, %6 : vector<512x128xf32>
    %cst_5 = arith.constant 0.000000e+00 : f32
    %8 = vector.broadcast %cst_5 : f32 to vector<512x128xf32>
    %9 = arith.maximumf %7, %8 : vector<512x128xf32>
    %c0_6 = arith.constant 0 : index
    %c0_7 = arith.constant 0 : index
    %10 = vector.load %arg4[%c0_6, %c0_7] : memref<512x128xf32, #tpu.memory_space<vmem>>, vector<512x128xf32>
    tpu.vector_store %arg4[%c0_6, %c0_7], %9 {strides = array<i32>} : memref<512x128xf32, #tpu.memory_space<vmem>>, vector<512x128xf32>,
    return
  }
  func.func @transform_0(%arg0: i32) -> (i32, i32) {
    %c0_i32 = arith.constant 0 : i32
    %c0_i32_0 = arith.constant 0 : i32
    return %arg0, %c0_i32 : i32, i32
  }
  func.func @transform_1(%arg0: i32) -> (i32, i32) {
    %c0_i32 = arith.constant 0 : i32
    %c0_i32_0 = arith.constant 0 : i32
    %c0_i32_1 = arith.constant 0 : i32
    return %c0_i32, %c0_i32_0 : i32, i32
  }
  func.func @transform_2(%arg0: i32) -> (i32, i32) {
    %c0_i32 = arith.constant 0 : i32
    %c0_i32_0 = arith.constant 0 : i32
    %c0_i32_1 = arith.constant 0 : i32
    return %c0_i32, %c0_i32_0 : i32, i32
  }
  func.func @transform_3(%arg0: i32) -> (i32, i32) {
    %c0_i32 = arith.constant 0 : i32
    %c0_i32_0 = arith.constant 0 : i32
    return %arg0, %c0_i32 : i32, i32
  }
}

module attributes {stable_mosaic.version = 11 : i64} {
  func.func @_dw_conv_kernel(%arg0: i32, %arg1: memref<1x18x18x128xf32, #tpu.memory_space<vmem>>, %arg2: memref<9x128xf32, #tpu.memory_space<vmem>>, %arg3: memref<1x128xf32, #tpu.memory_space<vmem>>, %arg4: memref<1x16x16x128xf32, #tpu.memory_space<vmem>>) attributes {dimension_semantics = [#tpu.dimension_semantics<parallel>], iteration_bounds = array<i64: 2>, scalar_prefetch = 0 : i64, scratch_operands = 0 : i64, tpu.core_type = #tpu.core_type<tc>, window_params = [{transform_indices = @transform_0, window_bounds = array<i64: 1, 18, 18, 128>}, {pipeline_mode = #tpu.pipeline_mode<synchronous>, transform_indices = @transform_1, window_bounds = array<i64: 9, 128>}, {pipeline_mode = #tpu.pipeline_mode<synchronous>, transform_indices = @transform_2, window_bounds = array<i64: 1, 128>}, {transform_indices = @transform_3, window_bounds = array<i64: 1, 16, 16, 128>}]} {
    %cst = arith.constant 0.000000e+00 : f32
    %0 = vector.broadcast %cst : f32 to vector<16x16x128xf32>
    %c0 = arith.constant 0 : index
    %c0_0 = arith.constant 0 : index
    %c0_1 = arith.constant 0 : index
    %c0_2 = arith.constant 0 : index
    %1 = vector.load %arg1[%c0, %c0_0, %c0_1, %c0_2] : memref<1x18x18x128xf32, #tpu.memory_space<vmem>>, vector<1x16x16x128xf32>
    %2 = vector.shape_cast %1 : vector<1x16x16x128xf32> to vector<16x16x128xf32>
    %c0_3 = arith.constant 0 : index
    %c0_4 = arith.constant 0 : index
    %3 = vector.load %arg2[%c0_3, %c0_4] : memref<9x128xf32, #tpu.memory_space<vmem>>, vector<1x128xf32>
    %4 = vector.shape_cast %3 : vector<1x128xf32> to vector<1x1x128xf32>
    %5 = vector.broadcast %4 : vector<1x1x128xf32> to vector<16x16x128xf32>
    %6 = arith.mulf %2, %5 : vector<16x16x128xf32>
    %7 = arith.addf %0, %6 : vector<16x16x128xf32>
    %c0_5 = arith.constant 0 : index
    %c0_6 = arith.constant 0 : index
    %c1 = arith.constant 1 : index
    %c0_7 = arith.constant 0 : index
    %8 = vector.load %arg1[%c0_5, %c0_6, %c1, %c0_7] : memref<1x18x18x128xf32, #tpu.memory_space<vmem>>, vector<1x16x16x128xf32>
    %9 = vector.shape_cast %8 : vector<1x16x16x128xf32> to vector<16x16x128xf32>
    %c1_8 = arith.constant 1 : index
    %c0_9 = arith.constant 0 : index
    %10 = vector.load %arg2[%c1_8, %c0_9] : memref<9x128xf32, #tpu.memory_space<vmem>>, vector<1x128xf32>
    %11 = vector.shape_cast %10 : vector<1x128xf32> to vector<1x1x128xf32>
    %12 = vector.broadcast %11 : vector<1x1x128xf32> to vector<16x16x128xf32>
    %13 = arith.mulf %9, %12 : vector<16x16x128xf32>
    %14 = arith.addf %7, %13 : vector<16x16x128xf32>
    %c0_10 = arith.constant 0 : index
    %c0_11 = arith.constant 0 : index
    %c2 = arith.constant 2 : index
    %c0_12 = arith.constant 0 : index
    %15 = vector.load %arg1[%c0_10, %c0_11, %c2, %c0_12] : memref<1x18x18x128xf32, #tpu.memory_space<vmem>>, vector<1x16x16x128xf32>
    %16 = vector.shape_cast %15 : vector<1x16x16x128xf32> to vector<16x16x128xf32>
    %c2_13 = arith.constant 2 : index
    %c0_14 = arith.constant 0 : index
    %17 = vector.load %arg2[%c2_13, %c0_14] : memref<9x128xf32, #tpu.memory_space<vmem>>, vector<1x128xf32>
    %18 = vector.shape_cast %17 : vector<1x128xf32> to vector<1x1x128xf32>
    %19 = vector.broadcast %18 : vector<1x1x128xf32> to vector<16x16x128xf32>
    %20 = arith.mulf %16, %19 : vector<16x16x128xf32>
    %21 = arith.addf %14, %20 : vector<16x16x128xf32>
    %c0_15 = arith.constant 0 : index
    %c1_16 = arith.constant 1 : index
    %c0_17 = arith.constant 0 : index
    %c0_18 = arith.constant 0 : index
    %22 = vector.load %arg1[%c0_15, %c1_16, %c0_17, %c0_18] : memref<1x18x18x128xf32, #tpu.memory_space<vmem>>, vector<1x16x16x128xf32>
    %23 = vector.shape_cast %22 : vector<1x16x16x128xf32> to vector<16x16x128xf32>
    %c3 = arith.constant 3 : index
    %c0_19 = arith.constant 0 : index
    %24 = vector.load %arg2[%c3, %c0_19] : memref<9x128xf32, #tpu.memory_space<vmem>>, vector<1x128xf32>
    %25 = vector.shape_cast %24 : vector<1x128xf32> to vector<1x1x128xf32>
    %26 = vector.broadcast %25 : vector<1x1x128xf32> to vector<16x16x128xf32>
    %27 = arith.mulf %23, %26 : vector<16x16x128xf32>
    %28 = arith.addf %21, %27 : vector<16x16x128xf32>
    %c0_20 = arith.constant 0 : index
    %c1_21 = arith.constant 1 : index
    %c1_22 = arith.constant 1 : index
    %c0_23 = arith.constant 0 : index
    %29 = vector.load %arg1[%c0_20, %c1_21, %c1_22, %c0_23] : memref<1x18x18x128xf32, #tpu.memory_space<vmem>>, vector<1x16x16x128xf32>
    %30 = vector.shape_cast %29 : vector<1x16x16x128xf32> to vector<16x16x128xf32>
    %c4 = arith.constant 4 : index
    %c0_24 = arith.constant 0 : index
    %31 = vector.load %arg2[%c4, %c0_24] : memref<9x128xf32, #tpu.memory_space<vmem>>, vector<1x128xf32>
    %32 = vector.shape_cast %31 : vector<1x128xf32> to vector<1x1x128xf32>
    %33 = vector.broadcast %32 : vector<1x1x128xf32> to vector<16x16x128xf32>
    %34 = arith.mulf %30, %33 : vector<16x16x128xf32>
    %35 = arith.addf %28, %34 : vector<16x16x128xf32>
    %c0_25 = arith.constant 0 : index
    %c1_26 = arith.constant 1 : index
    %c2_27 = arith.constant 2 : index
    %c0_28 = arith.constant 0 : index
    %36 = vector.load %arg1[%c0_25, %c1_26, %c2_27, %c0_28] : memref<1x18x18x128xf32, #tpu.memory_space<vmem>>, vector<1x16x16x128xf32>
    %37 = vector.shape_cast %36 : vector<1x16x16x128xf32> to vector<16x16x128xf32>
    %c5 = arith.constant 5 : index
    %c0_29 = arith.constant 0 : index
    %38 = vector.load %arg2[%c5, %c0_29] : memref<9x128xf32, #tpu.memory_space<vmem>>, vector<1x128xf32>
    %39 = vector.shape_cast %38 : vector<1x128xf32> to vector<1x1x128xf32>
    %40 = vector.broadcast %39 : vector<1x1x128xf32> to vector<16x16x128xf32>
    %41 = arith.mulf %37, %40 : vector<16x16x128xf32>
    %42 = arith.addf %35, %41 : vector<16x16x128xf32>
    %c0_30 = arith.constant 0 : index
    %c2_31 = arith.constant 2 : index
    %c0_32 = arith.constant 0 : index
    %c0_33 = arith.constant 0 : index
    %43 = vector.load %arg1[%c0_30, %c2_31, %c0_32, %c0_33] : memref<1x18x18x128xf32, #tpu.memory_space<vmem>>, vector<1x16x16x128xf32>
    %44 = vector.shape_cast %43 : vector<1x16x16x128xf32> to vector<16x16x128xf32>
    %c6 = arith.constant 6 : index
    %c0_34 = arith.constant 0 : index
    %45 = vector.load %arg2[%c6, %c0_34] : memref<9x128xf32, #tpu.memory_space<vmem>>, vector<1x128xf32>
    %46 = vector.shape_cast %45 : vector<1x128xf32> to vector<1x1x128xf32>
    %47 = vector.broadcast %46 : vector<1x1x128xf32> to vector<16x16x128xf32>
    %48 = arith.mulf %44, %47 : vector<16x16x128xf32>
    %49 = arith.addf %42, %48 : vector<16x16x128xf32>
    %c0_35 = arith.constant 0 : index
    %c2_36 = arith.constant 2 : index
    %c1_37 = arith.constant 1 : index
    %c0_38 = arith.constant 0 : index
    %50 = vector.load %arg1[%c0_35, %c2_36, %c1_37, %c0_38] : memref<1x18x18x128xf32, #tpu.memory_space<vmem>>, vector<1x16x16x128xf32>
    %51 = vector.shape_cast %50 : vector<1x16x16x128xf32> to vector<16x16x128xf32>
    %c7 = arith.constant 7 : index
    %c0_39 = arith.constant 0 : index
    %52 = vector.load %arg2[%c7, %c0_39] : memref<9x128xf32, #tpu.memory_space<vmem>>, vector<1x128xf32>
    %53 = vector.shape_cast %52 : vector<1x128xf32> to vector<1x1x128xf32>
    %54 = vector.broadcast %53 : vector<1x1x128xf32> to vector<16x16x128xf32>
    %55 = arith.mulf %51, %54 : vector<16x16x128xf32>
    %56 = arith.addf %49, %55 : vector<16x16x128xf32>
    %c0_40 = arith.constant 0 : index
    %c2_41 = arith.constant 2 : index
    %c2_42 = arith.constant 2 : index
    %c0_43 = arith.constant 0 : index
    %57 = vector.load %arg1[%c0_40, %c2_41, %c2_42, %c0_43] : memref<1x18x18x128xf32, #tpu.memory_space<vmem>>, vector<1x16x16x128xf32>
    %58 = vector.shape_cast %57 : vector<1x16x16x128xf32> to vector<16x16x128xf32>
    %c8 = arith.constant 8 : index
    %c0_44 = arith.constant 0 : index
    %59 = vector.load %arg2[%c8, %c0_44] : memref<9x128xf32, #tpu.memory_space<vmem>>, vector<1x128xf32>
    %60 = vector.shape_cast %59 : vector<1x128xf32> to vector<1x1x128xf32>
    %61 = vector.broadcast %60 : vector<1x1x128xf32> to vector<16x16x128xf32>
    %62 = arith.mulf %58, %61 : vector<16x16x128xf32>
    %63 = arith.addf %56, %62 : vector<16x16x128xf32>
    %c0_45 = arith.constant 0 : index
    %c0_46 = arith.constant 0 : index
    %64 = vector.load %arg3[%c0_45, %c0_46] : memref<1x128xf32, #tpu.memory_space<vmem>>, vector<1x128xf32>
    %65 = vector.shape_cast %64 : vector<1x128xf32> to vector<1x1x128xf32>
    %66 = vector.broadcast %65 : vector<1x1x128xf32> to vector<16x16x128xf32>
    %67 = arith.addf %63, %66 : vector<16x16x128xf32>
    %c0_47 = arith.constant 0 : index
    %c0_48 = arith.constant 0 : index
    %c0_49 = arith.constant 0 : index
    %c0_50 = arith.constant 0 : index
    %68 = vector.load %arg4[%c0_47, %c0_48, %c0_49, %c0_50] : memref<1x16x16x128xf32, #tpu.memory_space<vmem>>, vector<1x16x16x128xf32>
    %69 = vector.shape_cast %68 : vector<1x16x16x128xf32> to vector<16x16x128xf32>
    %70 = vector.shape_cast %67 : vector<16x16x128xf32> to vector<1x16x16x128xf32>
    tpu.vector_store %arg4[%c0_47, %c0_48, %c0_49, %c0_50], %70 {strides = array<i32>} : memref<1x16x16x128xf32, #tpu.memory_space<vmem>>, vector<1x16x16x128xf32>,
    return
  }
  func.func @transform_0(%arg0: i32) -> (i32, i32, i32, i32) {
    %c0_i32 = arith.constant 0 : i32
    %c0_i32_0 = arith.constant 0 : i32
    %c0_i32_1 = arith.constant 0 : i32
    %c0_i32_2 = arith.constant 0 : i32
    return %arg0, %c0_i32, %c0_i32_0, %c0_i32_1 : i32, i32, i32, i32
  }
  func.func @transform_1(%arg0: i32) -> (i32, i32) {
    %c0_i32 = arith.constant 0 : i32
    %c0_i32_0 = arith.constant 0 : i32
    %c0_i32_1 = arith.constant 0 : i32
    return %c0_i32, %c0_i32_0 : i32, i32
  }
  func.func @transform_2(%arg0: i32) -> (i32, i32) {
    %c0_i32 = arith.constant 0 : i32
    %c0_i32_0 = arith.constant 0 : i32
    %c0_i32_1 = arith.constant 0 : i32
    return %c0_i32, %c0_i32_0 : i32, i32
  }
  func.func @transform_3(%arg0: i32) -> (i32, i32, i32, i32) {
    %c0_i32 = arith.constant 0 : i32
    %c0_i32_0 = arith.constant 0 : i32
    %c0_i32_1 = arith.constant 0 : i32
    %c0_i32_2 = arith.constant 0 : i32
    return %arg0, %c0_i32, %c0_i32_0, %c0_i32_1 : i32, i32, i32, i32
  }
}

</mosaic_0001>

<llo_original>
// kernel: shuffle_block_forward.3
$region0: #{shuffle_block_forward.3}
  #allocation0 [shape = 'u32[]', space=smem, size = 0x4, offset = 0x4, fixed_abs, tag = 'smem constant byte address 0x4 - core index']
  #allocation1 [shape = 'u32[72,128]{1,0:T(1,128)}', space=vmem, size = 0x9000, scoped, tag = 'internal scratch']
  %s0 = inlined_call_operand.vmem [shape: f32[512,128], index: 0, kind: input, shape index: {}]
  %s1 = inlined_call_operand.vmem [shape: f32[128,128], index: 1, kind: input, shape index: {}]
  %s2 = inlined_call_operand.vmem [shape: f32[1,128], index: 2, kind: input, shape index: {}]
  %s3 = inlined_call_operand.vmem [shape: f32[512,128], index: 3, kind: output, shape index: {}]
  %s4 = sld [smem:[#allocation0]]
  $region22: #{shuffle_block_forward.3} parent=0
    _
  %s6 = ssub.s32 1, %s4
  %s7 = scalar_select 0, %s6, %s4
  // Predicated region
  $region2: #{shuffle_block_forward.3} parent=0 // pred_check
    _
  $region3: #{shuffle_block_forward.3} parent=0 // pred_check_branch
    %9 = sbr.rel (0) target = $region5
  $region4: #{shuffle_block_forward.3} parent=0 // pred_region
    _
  $region5: #{shuffle_block_forward.3} parent=0 // pred_fallthru
    _
  // Predicated region
  $region6: #{shuffle_block_forward.3} parent=0 // pred_check
    _
  $region7: #{shuffle_block_forward.3} parent=0 // pred_check_branch
    %11 = sbr.rel (0) target = $region9
  $region8: #{shuffle_block_forward.3} parent=0 // pred_region
    _
  $region9: #{shuffle_block_forward.3} parent=0 // pred_fallthru
    _
  // Predicated region
  $region10: #{shuffle_block_forward.3} parent=0 // pred_check
    _
  $region11: #{shuffle_block_forward.3} parent=0 // pred_check_branch
    %13 = sbr.rel (0) target = $region13
  $region12: #{shuffle_block_forward.3} parent=0 // pred_region
    _
  $region13: #{shuffle_block_forward.3} parent=0 // pred_fallthru
    _
  %v14 = vld [vmem:[%s0] sm:$0xff]
  %v15 = vld [vmem:[%s0 + $0x8] sm:$0xff]
  %v16 = vld [vmem:[%s0 + $0x10] sm:$0xff]
  %v17 = vld [vmem:[%s0 + $0x18] sm:$0xff]
  %v18 = vld [vmem:[%s0 + $0x20] sm:$0xff]
  %v19 = vld [vmem:[%s0 + $0x28] sm:$0xff]
  %v20 = vld [vmem:[%s0 + $0x30] sm:$0xff]
  %v21 = vld [vmem:[%s0 + $0x38] sm:$0xff]
  %v22 = vld [vmem:[%s0 + $0x40] sm:$0xff]
  %v23 = vld [vmem:[%s0 + $0x48] sm:$0xff]
  %v24 = vld [vmem:[%s0 + $0x50] sm:$0xff]
  %v25 = vld [vmem:[%s0 + $0x58] sm:$0xff]
  %v26 = vld [vmem:[%s0 + $0x60] sm:$0xff]
  %v27 = vld [vmem:[%s0 + $0x68] sm:$0xff]
  %v28 = vld [vmem:[%s0 + $0x70] sm:$0xff]
  %v29 = vld [vmem:[%s0 + $0x78] sm:$0xff]
  %v30 = vld [vmem:[%s0 + $0x80] sm:$0xff]
  %v31 = vld [vmem:[%s0 + $0x88] sm:$0xff]
  %v32 = vld [vmem:[%s0 + $0x90] sm:$0xff]
  %v33 = vld [vmem:[%s0 + $0x98] sm:$0xff]
  %v34 = vld [vmem:[%s0 + $0xa0] sm:$0xff]
  %v35 = vld [vmem:[%s0 + $0xa8] sm:$0xff]
  %v36 = vld [vmem:[%s0 + $0xb0] sm:$0xff]
  %v37 = vld [vmem:[%s0 + $0xb8] sm:$0xff]
  %v38 = vld [vmem:[%s0 + $0xc0] sm:$0xff]
  %v39 = vld [vmem:[%s0 + $0xc8] sm:$0xff]
  %v40 = vld [vmem:[%s0 + $0xd0] sm:$0xff]
  %v41 = vld [vmem:[%s0 + $0xd8] sm:$0xff]
  %v42 = vld [vmem:[%s0 + $0xe0] sm:$0xff]
  %v43 = vld [vmem:[%s0 + $0xe8] sm:$0xff]
  %v44 = vld [vmem:[%s0 + $0xf0] sm:$0xff]
  %v45 = vld [vmem:[%s0 + $0xf8] sm:$0xff]
  %v46 = vld [vmem:[%s0 + $0x100] sm:$0xff]
  %v47 = vld [vmem:[%s0 + $0x108] sm:$0xff]
  %v48 = vld [vmem:[%s0 + $0x110] sm:$0xff]
  %v49 = vld [vmem:[%s0 + $0x118] sm:$0xff]
  %v50 = vld [vmem:[%s0 + $0x120] sm:$0xff]
  %v51 = vld [vmem:[%s0 + $0x128] sm:$0xff]
  %v52 = vld [vmem:[%s0 + $0x130] sm:$0xff]
  %v53 = vld [vmem:[%s0 + $0x138] sm:$0xff]
  %v54 = vld [vmem:[%s0 + $0x140] sm:$0xff]
  %v55 = vld [vmem:[%s0 + $0x148] sm:$0xff]
  %v56 = vld [vmem:[%s0 + $0x150] sm:$0xff]
  %v57 = vld [vmem:[%s0 + $0x158] sm:$0xff]
  %v58 = vld [vmem:[%s0 + $0x160] sm:$0xff]
  %v59 = vld [vmem:[%s0 + $0x168] sm:$0xff]
  %v60 = vld [vmem:[%s0 + $0x170] sm:$0xff]
  %v61 = vld [vmem:[%s0 + $0x178] sm:$0xff]
  %v62 = vld [vmem:[%s0 + $0x180] sm:$0xff]
  %v63 = vld [vmem:[%s0 + $0x188] sm:$0xff]
  %v64 = vld [vmem:[%s0 + $0x190] sm:$0xff]
  %v65 = vld [vmem:[%s0 + $0x198] sm:$0xff]
  %v66 = vld [vmem:[%s0 + $0x1a0] sm:$0xff]
  %v67 = vld [vmem:[%s0 + $0x1a8] sm:$0xff]
  %v68 = vld [vmem:[%s0 + $0x1b0] sm:$0xff]
  %v69 = vld [vmem:[%s0 + $0x1b8] sm:$0xff]
  %v70 = vld [vmem:[%s0 + $0x1c0] sm:$0xff]
  %v71 = vld [vmem:[%s0 + $0x1c8] sm:$0xff]
  %v72 = vld [vmem:[%s0 + $0x1d0] sm:$0xff]
  %v73 = vld [vmem:[%s0 + $0x1d8] sm:$0xff]
  %v74 = vld [vmem:[%s0 + $0x1e0] sm:$0xff]
  %v75 = vld [vmem:[%s0 + $0x1e8] sm:$0xff]
  %v76 = vld [vmem:[%s0 + $0x1f0] sm:$0xff]
  %v77 = vld [vmem:[%s0 + $0x1f8] sm:$0xff]
  %v78 = vpack.c.bf16 %v15, %v14
  %v79 = vpack.c.bf16 %v17, %v16
  %v80 = vpack.c.bf16 %v19, %v18
  %v81 = vpack.c.bf16 %v21, %v20
  %v82 = vpack.c.bf16 %v23, %v22
  %v83 = vpack.c.bf16 %v25, %v24
  %v84 = vpack.c.bf16 %v27, %v26
  %v85 = vpack.c.bf16 %v29, %v28
  %v86 = vpack.c.bf16 %v31, %v30
  %v87 = vpack.c.bf16 %v33, %v32
  %v88 = vpack.c.bf16 %v35, %v34
  %v89 = vpack.c.bf16 %v37, %v36
  %v90 = vpack.c.bf16 %v39, %v38
  %v91 = vpack.c.bf16 %v41, %v40
  %v92 = vpack.c.bf16 %v43, %v42
  %v93 = vpack.c.bf16 %v45, %v44
  %v94 = vpack.c.bf16 %v47, %v46
  %v95 = vpack.c.bf16 %v49, %v48
  %v96 = vpack.c.bf16 %v51, %v50
  %v97 = vpack.c.bf16 %v53, %v52
  %v98 = vpack.c.bf16 %v55, %v54
  %v99 = vpack.c.bf16 %v57, %v56
  %v100 = vpack.c.bf16 %v59, %v58
  %v101 = vpack.c.bf16 %v61, %v60
  %v102 = vpack.c.bf16 %v63, %v62
  %v103 = vpack.c.bf16 %v65, %v64
  %v104 = vpack.c.bf16 %v67, %v66
  %v105 = vpack.c.bf16 %v69, %v68
  %v106 = vpack.c.bf16 %v71, %v70
  %v107 = vpack.c.bf16 %v73, %v72
  %v108 = vpack.c.bf16 %v75, %v74
  %v109 = vpack.c.bf16 %v77, %v76
  %v110 = vld [vmem:[%s1] sm:$0xff]
  %v111 = vld [vmem:[%s1 + $0x8] sm:$0xff]
  %v112 = vld [vmem:[%s1 + $0x10] sm:$0xff]
  %v113 = vld [vmem:[%s1 + $0x18] sm:$0xff]
  %v114 = vld [vmem:[%s1 + $0x20] sm:$0xff]
  %v115 = vld [vmem:[%s1 + $0x28] sm:$0xff]
  %v116 = vld [vmem:[%s1 + $0x30] sm:$0xff]
  %v117 = vld [vmem:[%s1 + $0x38] sm:$0xff]
  %v118 = vld [vmem:[%s1 + $0x40] sm:$0xff]
  %v119 = vld [vmem:[%s1 + $0x48] sm:$0xff]
  %v120 = vld [vmem:[%s1 + $0x50] sm:$0xff]
  %v121 = vld [vmem:[%s1 + $0x58] sm:$0xff]
  %v122 = vld [vmem:[%s1 + $0x60] sm:$0xff]
  %v123 = vld [vmem:[%s1 + $0x68] sm:$0xff]
  %v124 = vld [vmem:[%s1 + $0x70] sm:$0xff]
  %v125 = vld [vmem:[%s1 + $0x78] sm:$0xff]
  %v126 = vpack.c.bf16 %v111, %v110
  %v127 = vpack.c.bf16 %v113, %v112
  %v128 = vpack.c.bf16 %v115, %v114
  %v129 = vpack.c.bf16 %v117, %v116
  %v130 = vpack.c.bf16 %v119, %v118
  %v131 = vpack.c.bf16 %v121, %v120
  %v132 = vpack.c.bf16 %v123, %v122
  %v133 = vpack.c.bf16 %v125, %v124
  %v134 = vld [vmem:[%s2] sm:$0x1]
  %v136 = vperm.slane %v134, 0
  %138 = vmatpush.bf16.msra.mxu0 %v133
  %139 = vmatpush.bf16.msra.mxu0 %v132
  %140 = vmatpush.bf16.msra.mxu0 %v131
  %141 = vmatpush.bf16.msra.mxu0 %v130
  %142 = vmatpush.bf16.msra.mxu0 %v129
  %143 = vmatpush.bf16.msra.mxu0 %v128
  %144 = vmatpush.bf16.msra.mxu0 %v127
  %145 = vmatpush.bf16.msra.mxu0 %v126
  %146 = vmatmul.bf16.gmra.mxu0 %v78
  %v147 = vpop.f32.mrf.mxu0
  %v148 = vadd.f32 %v136, %v147
  %v149 = vpop.f32.mrf.mxu0
  %v150 = vadd.f32 %v136, %v149
  %151 = vmatmul.bf16.gmra.mxu0 %v79
  %v152 = vpop.f32.mrf.mxu0
  %v153 = vadd.f32 %v136, %v152
  %v154 = vpop.f32.mrf.mxu0
  %v155 = vadd.f32 %v136, %v154
  %156 = vmatmul.bf16.gmra.mxu0 %v80
  %v157 = vpop.f32.mrf.mxu0
  %v158 = vadd.f32 %v136, %v157
  %v159 = vpop.f32.mrf.mxu0
  %v160 = vadd.f32 %v136, %v159
  %161 = vmatmul.bf16.gmra.mxu0 %v81
  %v162 = vpop.f32.mrf.mxu0
  %v163 = vadd.f32 %v136, %v162
  %v164 = vpop.f32.mrf.mxu0
  %v165 = vadd.f32 %v136, %v164
  %166 = vmatmul.bf16.gmra.mxu0 %v82
  %v167 = vpop.f32.mrf.mxu0
  %v168 = vadd.f32 %v136, %v167
  %v169 = vpop.f32.mrf.mxu0
  %v170 = vadd.f32 %v136, %v169
  %171 = vmatmul.bf16.gmra.mxu0 %v83
  %v172 = vpop.f32.mrf.mxu0
  %v173 = vadd.f32 %v136, %v172
  %v174 = vpop.f32.mrf.mxu0
  %v175 = vadd.f32 %v136, %v174
  %176 = vmatmul.bf16.gmra.mxu0 %v84
  %v177 = vpop.f32.mrf.mxu0
  %v178 = vadd.f32 %v136, %v177
  %v179 = vpop.f32.mrf.mxu0
  %v180 = vadd.f32 %v136, %v179
  %181 = vmatmul.bf16.gmra.mxu0 %v85
  %v182 = vpop.f32.mrf.mxu0
  %v183 = vadd.f32 %v136, %v182
  %v184 = vpop.f32.mrf.mxu0
  %v185 = vadd.f32 %v136, %v184
  %186 = vmatmul.bf16.gmra.mxu0 %v86
  %v187 = vpop.f32.mrf.mxu0
  %v188 = vadd.f32 %v136, %v187
  %v189 = vpop.f32.mrf.mxu0
  %v190 = vadd.f32 %v136, %v189
  %191 = vmatmul.bf16.gmra.mxu0 %v87
  %v192 = vpop.f32.mrf.mxu0
  %v193 = vadd.f32 %v136, %v192
  %v194 = vpop.f32.mrf.mxu0
  %v195 = vadd.f32 %v136, %v194
  %196 = vmatmul.bf16.gmra.mxu0 %v88
  %v197 = vpop.f32.mrf.mxu0
  %v198 = vadd.f32 %v136, %v197
  %v199 = vpop.f32.mrf.mxu0
  %v200 = vadd.f32 %v136, %v199
  %201 = vmatmul.bf16.gmra.mxu0 %v89
  %v202 = vpop.f32.mrf.mxu0
  %v203 = vadd.f32 %v136, %v202
  %v204 = vpop.f32.mrf.mxu0
  %v205 = vadd.f32 %v136, %v204
  %206 = vmatmul.bf16.gmra.mxu0 %v90
  %v207 = vpop.f32.mrf.mxu0
  %v208 = vadd.f32 %v136, %v207
  %v209 = vpop.f32.mrf.mxu0
  %v210 = vadd.f32 %v136, %v209
  %211 = vmatmul.bf16.gmra.mxu0 %v91
  %v212 = vpop.f32.mrf.mxu0
  %v213 = vadd.f32 %v136, %v212
  %v214 = vpop.f32.mrf.mxu0
  %v215 = vadd.f32 %v136, %v214
  %216 = vmatmul.bf16.gmra.mxu0 %v92
  %v217 = vpop.f32.mrf.mxu0
  %v218 = vadd.f32 %v136, %v217
  %v219 = vpop.f32.mrf.mxu0
  %v220 = vadd.f32 %v136, %v219
  %221 = vmatmul.bf16.gmra.mxu0 %v93
  %v222 = vpop.f32.mrf.mxu0
  %v223 = vadd.f32 %v136, %v222
  %v224 = vpop.f32.mrf.mxu0
  %v225 = vadd.f32 %v136, %v224
  %226 = vmatmul.bf16.gmra.mxu0 %v94
  %v227 = vpop.f32.mrf.mxu0
  %v228 = vadd.f32 %v136, %v227
  %v229 = vpop.f32.mrf.mxu0
  %v230 = vadd.f32 %v136, %v229
  %231 = vmatmul.bf16.gmra.mxu0 %v95
  %v232 = vpop.f32.mrf.mxu0
  %v233 = vadd.f32 %v136, %v232
  %v234 = vpop.f32.mrf.mxu0
  %v235 = vadd.f32 %v136, %v234
  %236 = vmatmul.bf16.gmra.mxu0 %v96
  %v237 = vpop.f32.mrf.mxu0
  %v238 = vadd.f32 %v136, %v237
  %v239 = vpop.f32.mrf.mxu0
  %v240 = vadd.f32 %v136, %v239
  %241 = vmatmul.bf16.gmra.mxu0 %v97
  %v242 = vpop.f32.mrf.mxu0
  %v243 = vadd.f32 %v136, %v242
  %v244 = vpop.f32.mrf.mxu0
  %v245 = vadd.f32 %v136, %v244
  %246 = vmatmul.bf16.gmra.mxu0 %v98
  %v247 = vpop.f32.mrf.mxu0
  %v248 = vadd.f32 %v136, %v247
  %v249 = vpop.f32.mrf.mxu0
  %v250 = vadd.f32 %v136, %v249
  %251 = vmatmul.bf16.gmra.mxu0 %v99
  %v252 = vpop.f32.mrf.mxu0
  %v253 = vadd.f32 %v136, %v252
  %v254 = vpop.f32.mrf.mxu0
  %v255 = vadd.f32 %v136, %v254
  %256 = vmatmul.bf16.gmra.mxu0 %v100
  %v257 = vpop.f32.mrf.mxu0
  %v258 = vadd.f32 %v136, %v257
  %v259 = vpop.f32.mrf.mxu0
  %v260 = vadd.f32 %v136, %v259
  %261 = vmatmul.bf16.gmra.mxu0 %v101
  %v262 = vpop.f32.mrf.mxu0
  %v263 = vadd.f32 %v136, %v262
  %v264 = vpop.f32.mrf.mxu0
  %v265 = vadd.f32 %v136, %v264
  %266 = vmatmul.bf16.gmra.mxu0 %v102
  %v267 = vpop.f32.mrf.mxu0
  %v268 = vadd.f32 %v136, %v267
  %v269 = vpop.f32.mrf.mxu0
  %v270 = vadd.f32 %v136, %v269
  %271 = vmatmul.bf16.gmra.mxu0 %v103
  %v272 = vpop.f32.mrf.mxu0
  %v273 = vadd.f32 %v136, %v272
  %v274 = vpop.f32.mrf.mxu0
  %v275 = vadd.f32 %v136, %v274
  %276 = vmatmul.bf16.gmra.mxu0 %v104
  %v277 = vpop.f32.mrf.mxu0
  %v278 = vadd.f32 %v136, %v277
  %v279 = vpop.f32.mrf.mxu0
  %v280 = vadd.f32 %v136, %v279
  %281 = vmatmul.bf16.gmra.mxu0 %v105
  %v282 = vpop.f32.mrf.mxu0
  %v283 = vadd.f32 %v136, %v282
  %v284 = vpop.f32.mrf.mxu0
  %v285 = vadd.f32 %v136, %v284
  %286 = vmatmul.bf16.gmra.mxu0 %v106
  %v287 = vpop.f32.mrf.mxu0
  %v288 = vadd.f32 %v136, %v287
  %v289 = vpop.f32.mrf.mxu0
  %v290 = vadd.f32 %v136, %v289
  %291 = vmatmul.bf16.gmra.mxu0 %v107
  %v292 = vpop.f32.mrf.mxu0
  %v293 = vadd.f32 %v136, %v292
  %v294 = vpop.f32.mrf.mxu0
  %v295 = vadd.f32 %v136, %v294
  %296 = vmatmul.bf16.gmra.mxu0 %v108
  %v297 = vpop.f32.mrf.mxu0
  %v298 = vadd.f32 %v136, %v297
  %v299 = vpop.f32.mrf.mxu0
  %v300 = vadd.f32 %v136, %v299
  %301 = vmatmul.bf16.gmra.mxu0 %v109
  %v302 = vpop.f32.mrf.mxu0
  %v303 = vadd.f32 %v136, %v302
  %v304 = vpop.f32.mrf.mxu0
  %v305 = vadd.f32 %v136, %v304
  %306 = vdwg.mxu0
  %v307 = vmax.f32 %v148, 0.0
  %v308 = vmax.f32 %v150, 0.0
  %v309 = vmax.f32 %v153, 0.0
  %v310 = vmax.f32 %v155, 0.0
  %v311 = vmax.f32 %v158, 0.0
  %v312 = vmax.f32 %v160, 0.0
  %v313 = vmax.f32 %v163, 0.0
  %v314 = vmax.f32 %v165, 0.0
  %v315 = vmax.f32 %v168, 0.0
  %v316 = vmax.f32 %v170, 0.0
  %v317 = vmax.f32 %v173, 0.0
  %v318 = vmax.f32 %v175, 0.0
  %v319 = vmax.f32 %v178, 0.0
  %v320 = vmax.f32 %v180, 0.0
  %v321 = vmax.f32 %v183, 0.0
  %v322 = vmax.f32 %v185, 0.0
  %v323 = vmax.f32 %v188, 0.0
  %v324 = vmax.f32 %v190, 0.0
  %v325 = vmax.f32 %v193, 0.0
  %v326 = vmax.f32 %v195, 0.0
  %v327 = vmax.f32 %v198, 0.0
  %v328 = vmax.f32 %v200, 0.0
  %v329 = vmax.f32 %v203, 0.0
  %v330 = vmax.f32 %v205, 0.0
  %v331 = vmax.f32 %v208, 0.0
  %v332 = vmax.f32 %v210, 0.0
  %v333 = vmax.f32 %v213, 0.0
  %v334 = vmax.f32 %v215, 0.0
  %v335 = vmax.f32 %v218, 0.0
  %v336 = vmax.f32 %v220, 0.0
  %v337 = vmax.f32 %v223, 0.0
  %v338 = vmax.f32 %v225, 0.0
  %v339 = vmax.f32 %v228, 0.0
  %v340 = vmax.f32 %v230, 0.0
  %v341 = vmax.f32 %v233, 0.0
  %v342 = vmax.f32 %v235, 0.0
  %v343 = vmax.f32 %v238, 0.0
  %v344 = vmax.f32 %v240, 0.0
  %v345 = vmax.f32 %v243, 0.0
  %v346 = vmax.f32 %v245, 0.0
  %v347 = vmax.f32 %v248, 0.0
  %v348 = vmax.f32 %v250, 0.0
  %v349 = vmax.f32 %v253, 0.0
  %v350 = vmax.f32 %v255, 0.0
  %v351 = vmax.f32 %v258, 0.0
  %v352 = vmax.f32 %v260, 0.0
  %v353 = vmax.f32 %v263, 0.0
  %v354 = vmax.f32 %v265, 0.0
  %v355 = vmax.f32 %v268, 0.0
  %v356 = vmax.f32 %v270, 0.0
  %v357 = vmax.f32 %v273, 0.0
  %v358 = vmax.f32 %v275, 0.0
  %v359 = vmax.f32 %v278, 0.0
  %v360 = vmax.f32 %v280, 0.0
  %v361 = vmax.f32 %v283, 0.0
  %v362 = vmax.f32 %v285, 0.0
  %v363 = vmax.f32 %v288, 0.0
  %v364 = vmax.f32 %v290, 0.0
  %v365 = vmax.f32 %v293, 0.0
  %v366 = vmax.f32 %v295, 0.0
  %v367 = vmax.f32 %v298, 0.0
  %v368 = vmax.f32 %v300, 0.0
  %v369 = vmax.f32 %v303, 0.0
  %v370 = vmax.f32 %v305, 0.0
  %371 = vst [vmem:[%s3] sm:$0xff] %v307
  %372 = vst [vmem:[%s3 + $0x8] sm:$0xff] %v308
  %373 = vst [vmem:[%s3 + $0x10] sm:$0xff] %v309
  %374 = vst [vmem:[%s3 + $0x18] sm:$0xff] %v310
  %375 = vst [vmem:[%s3 + $0x20] sm:$0xff] %v311
  %376 = vst [vmem:[%s3 + $0x28] sm:$0xff] %v312
  %377 = vst [vmem:[%s3 + $0x30] sm:$0xff] %v313
  %378 = vst [vmem:[%s3 + $0x38] sm:$0xff] %v314
  %379 = vst [vmem:[%s3 + $0x40] sm:$0xff] %v315
  %380 = vst [vmem:[%s3 + $0x48] sm:$0xff] %v316
  %381 = vst [vmem:[%s3 + $0x50] sm:$0xff] %v317
  %382 = vst [vmem:[%s3 + $0x58] sm:$0xff] %v318
  %383 = vst [vmem:[%s3 + $0x60] sm:$0xff] %v319
  %384 = vst [vmem:[%s3 + $0x68] sm:$0xff] %v320
  %385 = vst [vmem:[%s3 + $0x70] sm:$0xff] %v321
  %386 = vst [vmem:[%s3 + $0x78] sm:$0xff] %v322
  %387 = vst [vmem:[%s3 + $0x80] sm:$0xff] %v323
  %388 = vst [vmem:[%s3 + $0x88] sm:$0xff] %v324
  %389 = vst [vmem:[%s3 + $0x90] sm:$0xff] %v325
  %390 = vst [vmem:[%s3 + $0x98] sm:$0xff] %v326
  %391 = vst [vmem:[%s3 + $0xa0] sm:$0xff] %v327
  %392 = vst [vmem:[%s3 + $0xa8] sm:$0xff] %v328
  %393 = vst [vmem:[%s3 + $0xb0] sm:$0xff] %v329
  %394 = vst [vmem:[%s3 + $0xb8] sm:$0xff] %v330
  %395 = vst [vmem:[%s3 + $0xc0] sm:$0xff] %v331
  %396 = vst [vmem:[%s3 + $0xc8] sm:$0xff] %v332
  %397 = vst [vmem:[%s3 + $0xd0] sm:$0xff] %v333
  %398 = vst [vmem:[%s3 + $0xd8] sm:$0xff] %v334
  %399 = vst [vmem:[%s3 + $0xe0] sm:$0xff] %v335
  %400 = vst [vmem:[%s3 + $0xe8] sm:$0xff] %v336
  %401 = vst [vmem:[%s3 + $0xf0] sm:$0xff] %v337
  %402 = vst [vmem:[%s3 + $0xf8] sm:$0xff] %v338
  %403 = vst [vmem:[%s3 + $0x100] sm:$0xff] %v339
  %404 = vst [vmem:[%s3 + $0x108] sm:$0xff] %v340
  %405 = vst [vmem:[%s3 + $0x110] sm:$0xff] %v341
  %406 = vst [vmem:[%s3 + $0x118] sm:$0xff] %v342
  %407 = vst [vmem:[%s3 + $0x120] sm:$0xff] %v343
  %408 = vst [vmem:[%s3 + $0x128] sm:$0xff] %v344
  %409 = vst [vmem:[%s3 + $0x130] sm:$0xff] %v345
  %410 = vst [vmem:[%s3 + $0x138] sm:$0xff] %v346
  %411 = vst [vmem:[%s3 + $0x140] sm:$0xff] %v347
  %412 = vst [vmem:[%s3 + $0x148] sm:$0xff] %v348
  %413 = vst [vmem:[%s3 + $0x150] sm:$0xff] %v349
  %414 = vst [vmem:[%s3 + $0x158] sm:$0xff] %v350
  %415 = vst [vmem:[%s3 + $0x160] sm:$0xff] %v351
  %416 = vst [vmem:[%s3 + $0x168] sm:$0xff] %v352
  %417 = vst [vmem:[%s3 + $0x170] sm:$0xff] %v353
  %418 = vst [vmem:[%s3 + $0x178] sm:$0xff] %v354
  %419 = vst [vmem:[%s3 + $0x180] sm:$0xff] %v355
  %420 = vst [vmem:[%s3 + $0x188] sm:$0xff] %v356
  %421 = vst [vmem:[%s3 + $0x190] sm:$0xff] %v357
  %422 = vst [vmem:[%s3 + $0x198] sm:$0xff] %v358
  %423 = vst [vmem:[%s3 + $0x1a0] sm:$0xff] %v359
  %424 = vst [vmem:[%s3 + $0x1a8] sm:$0xff] %v360
  %425 = vst [vmem:[%s3 + $0x1b0] sm:$0xff] %v361
  %426 = vst [vmem:[%s3 + $0x1b8] sm:$0xff] %v362
  %427 = vst [vmem:[%s3 + $0x1c0] sm:$0xff] %v363
  %428 = vst [vmem:[%s3 + $0x1c8] sm:$0xff] %v364
  %429 = vst [vmem:[%s3 + $0x1d0] sm:$0xff] %v365
  %430 = vst [vmem:[%s3 + $0x1d8] sm:$0xff] %v366
  %431 = vst [vmem:[%s3 + $0x1e0] sm:$0xff] %v367
  %432 = vst [vmem:[%s3 + $0x1e8] sm:$0xff] %v368
  %433 = vst [vmem:[%s3 + $0x1f0] sm:$0xff] %v369
  %434 = vst [vmem:[%s3 + $0x1f8] sm:$0xff] %v370
  // Predicated region
  $region14: #{shuffle_block_forward.3} parent=0 // pred_check
    _
  $region15: #{shuffle_block_forward.3} parent=0 // pred_check_branch
    %436 = sbr.rel (0) target = $region17
  $region16: #{shuffle_block_forward.3} parent=0 // pred_region
    _
  $region17: #{shuffle_block_forward.3} parent=0 // pred_fallthru
    _
  // Predicated region
  $region18: #{shuffle_block_forward.3} parent=0 // pred_check
    _
  $region19: #{shuffle_block_forward.3} parent=0 // pred_check_branch
    %438 = sbr.rel (0) target = $region21
  $region20: #{shuffle_block_forward.3} parent=0 // pred_region
    _
  $region21: #{shuffle_block_forward.3} parent=0 // pred_fallthru
    _

// kernel: shuffle_block_forward.4
$region0: #{shuffle_block_forward.4}
  #allocation0 [shape = 'u32[]', space=smem, size = 0x4, offset = 0x4, fixed_abs, tag = 'smem constant byte address 0x4 - core index']
  #allocation1 [shape = 'u32[72,128]{1,0:T(1,128)}', space=vmem, size = 0x9000, scoped, tag = 'internal scratch']
  %s0 = inlined_call_operand.vmem [shape: f32[2,18,18,128], index: 0, kind: input, shape index: {}]
  %s1 = inlined_call_operand.vmem [shape: f32[9,128], index: 1, kind: input, shape index: {}]
  %s2 = inlined_call_operand.vmem [shape: f32[1,128], index: 2, kind: input, shape index: {}]
  %s3 = inlined_call_operand.vmem [shape: f32[2,16,16,128], index: 3, kind: output, shape index: {}]
  %s4 = sld [smem:[#allocation0]]
  $region45: #{shuffle_block_forward.4} parent=0
    _
  %s6 = ssub.s32 1, %s4
  %s7 = scalar_select 0, %s6, %s4
  loop: start=0, step=1, limit=4
  $region2: #{shuffle_block_forward.4} parent=0 // loop_pre_header
    _
  $region3: #{shuffle_block_forward.4} parent=0 // loop_header
    %s9 = sphi 0, %s13
    %p10 = scmp.ge.s32.totalorder %s9, 4
    %s19 = sphi 0, %s21
    %s22 = sphi 0, %s19
    %s23 = sphi 0, %s22
    %s39 = sphi 0, %s23
    %s43 = sphi 0, %s43
    %s45 = sphi 0, %s43
    %s46 = sphi 0, %s45
    %s60 = sphi 0, %s46
    %s64 = sphi 0, %s64
    %s66 = sphi 0, %s64
    %s67 = sphi 0, %s66
    %s81 = sphi 0, %s67
    %s87 = sphi 0, %s89
    %s90 = sphi 0, %s87
    %s91 = sphi 0, %s90
    %s107 = sphi 0, %s91
  $region4: #{shuffle_block_forward.4} parent=0 // loop_header_branch
    %12 = sbr.rel (%p10) target = $region8
  $region5: #{shuffle_block_forward.4} parent=0 // loop_body
    %s14 = ssub.s32 %s9, 1
    %s15 = ssub.s32 %s9, 2
    %s16 = sadd.s32 %s9, 1
    %s17 = ssub.s32 %s9, %s16
    %p18 = scmp.eq.s32.totalorder %s17, 0
    %s20 = sadd.s32 %s19, 1
    %s21 = scalar_select %p18, %s19, %s20
    %p24 = pneg %p18
    %p25 = scmp.eq.s32.totalorder %s9, 1
    %p26 = por %p24, %p25
    %p27 = scmp.ne.s32.totalorder %s19, %s22
    %p28 = scmp.eq.s32.totalorder %s9, 0
    %p29 = por %p27, %p28
    %p30 = scmp.ne.s32.totalorder %s19, %s22
    %p31 = scmp.eq.s32.totalorder %s14, 1
    %p32 = por %p30, %p31
    %p33 = scmp.ne.s32.totalorder %s22, %s23
    %p34 = scmp.eq.s32.totalorder %s14, 0
    %p35 = por %p33, %p34
    %p36 = scmp.ne.s32.totalorder %s22, %s23
    %p37 = scmp.eq.s32.totalorder %s15, 1
    %p38 = por %p36, %p37
    %p40 = scmp.ne.s32.totalorder %s23, %s39
    %p41 = scmp.eq.s32.totalorder %s15, 0
    %p42 = por %p40, %p41
    %s44 = sadd.s32 %s43, 1
    %p47 = scmp.eq.s32.totalorder %s9, 1
    %p48 = scmp.ne.s32.totalorder %s43, %s45
    %p49 = scmp.eq.s32.totalorder %s9, 0
    %p50 = por %p48, %p49
    %p51 = scmp.ne.s32.totalorder %s43, %s45
    %p52 = scmp.eq.s32.totalorder %s14, 1
    %p53 = por %p51, %p52
    %p54 = scmp.ne.s32.totalorder %s45, %s46
    %p55 = scmp.eq.s32.totalorder %s14, 0
    %p56 = por %p54, %p55
    %p57 = scmp.ne.s32.totalorder %s45, %s46
    %p58 = scmp.eq.s32.totalorder %s15, 1
    %p59 = por %p57, %p58
    %p61 = scmp.ne.s32.totalorder %s46, %s60
    %p62 = scmp.eq.s32.totalorder %s15, 0
    %p63 = por %p61, %p62
    %s65 = sadd.s32 %s64, 1
    %p68 = scmp.eq.s32.totalorder %s9, 1
    %p69 = scmp.ne.s32.totalorder %s64, %s66
    %p70 = scmp.eq.s32.totalorder %s9, 0
    %p71 = por %p69, %p70
    %p72 = scmp.ne.s32.totalorder %s64, %s66
    %p73 = scmp.eq.s32.totalorder %s14, 1
    %p74 = por %p72, %p73
    %p75 = scmp.ne.s32.totalorder %s66, %s67
    %p76 = scmp.eq.s32.totalorder %s14, 0
    %p77 = por %p75, %p76
    %p78 = scmp.ne.s32.totalorder %s66, %s67
    %p79 = scmp.eq.s32.totalorder %s15, 1
    %p80 = por %p78, %p79
    %p82 = scmp.ne.s32.totalorder %s67, %s81
    %p83 = scmp.eq.s32.totalorder %s15, 0
    %p84 = por %p82, %p83
    %s85 = ssub.s32 %s9, %s16
    %p86 = scmp.eq.s32.totalorder %s85, 0
    %s88 = sadd.s32 %s87, 1
    %s89 = scalar_select %p86, %s87, %s88
    %p92 = pneg %p86
    %p93 = scmp.eq.s32.totalorder %s9, 1
    %p94 = por %p92, %p93
    %p95 = scmp.ne.s32.totalorder %s87, %s90
    %p96 = scmp.eq.s32.totalorder %s9, 0
    %p97 = por %p95, %p96
    %p98 = scmp.ne.s32.totalorder %s87, %s90
    %p99 = scmp.eq.s32.totalorder %s14, 1
    %p100 = por %p98, %p99
    %p101 = scmp.ne.s32.totalorder %s90, %s91
    %p102 = scmp.eq.s32.totalorder %s14, 0
    %p103 = por %p101, %p102
    %p104 = scmp.ne.s32.totalorder %s90, %s91
    %p105 = scmp.eq.s32.totalorder %s15, 1
    %p106 = por %p104, %p105
    %p108 = scmp.ne.s32.totalorder %s91, %s107
    %p109 = scmp.eq.s32.totalorder %s15, 0
    %p110 = por %p108, %p109
    %p111 = scmp.le.s32.totalorder 1, %s9
    %p112 = scmp.lt.s32.totalorder %s9, 3
    %p113 = pnand %p111, %p112
    %p114 = pneg %p113
    // Predicated region
    $region9: #{shuffle_block_forward.4} parent=5 // pred_check
      _
    $region10: #{shuffle_block_forward.4} parent=5 // pred_check_branch
      %116 = sbr.rel (%p113) target = $region12
    $region11: #{shuffle_block_forward.4} parent=5 // pred_region
      %s117 = ssub.s32 %s9, 1
      // Predicated region
      $region13: #{shuffle_block_forward.4} parent=11 // pred_check
        %p118 = pneg %p56
      $region14: #{shuffle_block_forward.4} parent=11 // pred_check_branch
        %120 = sbr.rel (%p118) target = $region16
      $region15: #{shuffle_block_forward.4} parent=11 // pred_region
        _
      $region16: #{shuffle_block_forward.4} parent=11 // pred_fallthru
        _
      // Predicated region
      $region17: #{shuffle_block_forward.4} parent=11 // pred_check
        %p121 = pneg %p77
      $region18: #{shuffle_block_forward.4} parent=11 // pred_check_branch
        %123 = sbr.rel (%p121) target = $region20
      $region19: #{shuffle_block_forward.4} parent=11 // pred_region
        _
      $region20: #{shuffle_block_forward.4} parent=11 // pred_fallthru
        _
    $region12: #{shuffle_block_forward.4} parent=5 // pred_fallthru
      _
    %p124 = scmp.lt.s32.totalorder %s9, 2
    // Predicated region
    $region21: #{shuffle_block_forward.4} parent=5 // pred_check
      %p125 = pneg %p124
    $region22: #{shuffle_block_forward.4} parent=5 // pred_check_branch
      %127 = sbr.rel (%p125) target = $region24
    $region23: #{shuffle_block_forward.4} parent=5 // pred_region
      // Predicated region
      $region25: #{shuffle_block_forward.4} parent=23 // pred_check
        %p128 = pneg %p29
      $region26: #{shuffle_block_forward.4} parent=23 // pred_check_branch
        %130 = sbr.rel (%p128) target = $region28
      $region27: #{shuffle_block_forward.4} parent=23 // pred_region
        %p131 = scmp.lt.s32.totalorder %s9, 1
        %s132 = scalar_select %p131, %s9, 1
        %s133 = smul.addr %s132, 54
        %s134 = smul.addr %s133, 8
        %s135 = scalar_lea.vmem %s0, %s134
      $region28: #{shuffle_block_forward.4} parent=23 // pred_fallthru
        _
    $region24: #{shuffle_block_forward.4} parent=5 // pred_fallthru
      _
    %p136 = scmp.le.s32.totalorder 1, %s9
    %p137 = scmp.lt.s32.totalorder %s9, 3
    %p138 = pnand %p136, %p137
    %p139 = pneg %p138
    // Predicated region
    $region29: #{shuffle_block_forward.4} parent=5 // pred_check
      _
    $region30: #{shuffle_block_forward.4} parent=5 // pred_check_branch
      %141 = sbr.rel (%p138) target = $region32
    $region31: #{shuffle_block_forward.4} parent=5 // pred_region
      %s142 = ssub.s32 %s9, 1
      %p143 = scmp.lt.s32.totalorder %s14, 1
      %s144 = scalar_select %p143, %s14, 1
      %s145 = smul.addr %s144, 54
      %s146 = smul.addr %s145, 8
      %s147 = scalar_lea.vmem %s0, %s146
      %p148 = pneg %p35
      %p149 = pneg %p32
      %p150 = pneg %p56
      %p151 = pneg %p53
      %p152 = pneg %p77
      %p153 = pneg %p74
      %p154 = pneg %p103
      %p155 = pneg %p100
      %p156 = scmp.lt.s32.totalorder %s14, 1
      %s157 = scalar_select %p156, %s14, 1
      %s158 = smul.addr %s157, 32
      %s159 = smul.addr %s158, 8
      %s160 = scalar_lea.vmem %s3, %s159
      %p161 = scmp.lt.s32.totalorder %s14, 1
      %s162 = scalar_select %p161, %s14, 1
      %s163 = smul.addr %s162, 54
      %s164 = smul.addr %s163, 8
      %s165 = scalar_lea.vmem %s0, %s164
      %p166 = scmp.lt.s32.totalorder %s14, 1
      %s167 = scalar_select %p166, %s14, 1
      %s168 = smul.addr %s167, 32
      %s169 = smul.addr %s168, 8
      %s170 = scalar_lea.vmem %s3, %s169
      %v171 = vld [vmem:[%s165] sm:$0xff]
      %v172 = vld [vmem:[%s165 + $0x8] sm:$0xff]
      %v173 = vld [vmem:[%s165 + $0x18] sm:$0xff]
      %v174 = vld [vmem:[%s165 + $0x20] sm:$0xff]
      %v175 = vld [vmem:[%s165 + $0x30] sm:$0xff]
      %v176 = vld [vmem:[%s165 + $0x38] sm:$0xff]
      %v177 = vld [vmem:[%s165 + $0x48] sm:$0xff]
      %v178 = vld [vmem:[%s165 + $0x50] sm:$0xff]
      %v179 = vld [vmem:[%s165 + $0x60] sm:$0xff]
      %v180 = vld [vmem:[%s165 + $0x68] sm:$0xff]
      %v181 = vld [vmem:[%s165 + $0x78] sm:$0xff]
      %v182 = vld [vmem:[%s165 + $0x80] sm:$0xff]
      %v183 = vld [vmem:[%s165 + $0x90] sm:$0xff]
      %v184 = vld [vmem:[%s165 + $0x98] sm:$0xff]
      %v185 = vld [vmem:[%s165 + $0xa8] sm:$0xff]
      %v186 = vld [vmem:[%s165 + $0xb0] sm:$0xff]
      %v187 = vld [vmem:[%s165 + $0xc0] sm:$0xff]
      %v188 = vld [vmem:[%s165 + $0xc8] sm:$0xff]
      %v189 = vld [vmem:[%s165 + $0xd8] sm:$0xff]
      %v190 = vld [vmem:[%s165 + $0xe0] sm:$0xff]
      %v191 = vld [vmem:[%s165 + $0xf0] sm:$0xff]
      %v192 = vld [vmem:[%s165 + $0xf8] sm:$0xff]
      %v193 = vld [vmem:[%s165 + $0x108] sm:$0xff]
      %v194 = vld [vmem:[%s165 + $0x110] sm:$0xff]
      %v195 = vld [vmem:[%s165 + $0x120] sm:$0xff]
      %v196 = vld [vmem:[%s165 + $0x128] sm:$0xff]
      %v197 = vld [vmem:[%s165 + $0x138] sm:$0xff]
      %v198 = vld [vmem:[%s165 + $0x140] sm:$0xff]
      %v199 = vld [vmem:[%s165 + $0x150] sm:$0xff]
      %v200 = vld [vmem:[%s165 + $0x158] sm:$0xff]
      %v201 = vld [vmem:[%s165 + $0x168] sm:$0xff]
      %v202 = vld [vmem:[%s165 + $0x170] sm:$0xff]
      %v203 = vld [vmem:[%s1] sm:$0x1]
      %v204 = vperm.slane %v203, 0
      %v205 = vmul.f32 %v171, %v204
      %v206 = vmul.f32 %v172, %v204
      %v207 = vmul.f32 %v173, %v204
      %v208 = vmul.f32 %v174, %v204
      %v209 = vmul.f32 %v175, %v204
      %v210 = vmul.f32 %v176, %v204
      %v211 = vmul.f32 %v177, %v204
      %v212 = vmul.f32 %v178, %v204
      %v213 = vmul.f32 %v179, %v204
      %v214 = vmul.f32 %v180, %v204
      %v215 = vmul.f32 %v181, %v204
      %v216 = vmul.f32 %v182, %v204
      %v217 = vmul.f32 %v183, %v204
      %v218 = vmul.f32 %v184, %v204
      %v219 = vmul.f32 %v185, %v204
      %v220 = vmul.f32 %v186, %v204
      %v221 = vmul.f32 %v187, %v204
      %v222 = vmul.f32 %v188, %v204
      %v223 = vmul.f32 %v189, %v204
      %v224 = vmul.f32 %v190, %v204
      %v225 = vmul.f32 %v191, %v204
      %v226 = vmul.f32 %v192, %v204
      %v227 = vmul.f32 %v193, %v204
      %v228 = vmul.f32 %v194, %v204
      %v229 = vmul.f32 %v195, %v204
      %v230 = vmul.f32 %v196, %v204
      %v231 = vmul.f32 %v197, %v204
      %v232 = vmul.f32 %v198, %v204
      %v233 = vmul.f32 %v199, %v204
      %v234 = vmul.f32 %v200, %v204
      %v235 = vmul.f32 %v201, %v204
      %v236 = vmul.f32 %v202, %v204
      %v237 = vadd.f32 %v205, 0.0
      %v238 = vadd.f32 %v206, 0.0
      %v239 = vadd.f32 %v207, 0.0
      %v240 = vadd.f32 %v208, 0.0
      %v241 = vadd.f32 %v209, 0.0
      %v242 = vadd.f32 %v210, 0.0
      %v243 = vadd.f32 %v211, 0.0
      %v244 = vadd.f32 %v212, 0.0
      %v245 = vadd.f32 %v213, 0.0
      %v246 = vadd.f32 %v214, 0.0
      %v247 = vadd.f32 %v215, 0.0
      %v248 = vadd.f32 %v216, 0.0
      %v249 = vadd.f32 %v217, 0.0
      %v250 = vadd.f32 %v218, 0.0
      %v251 = vadd.f32 %v219, 0.0
      %v252 = vadd.f32 %v220, 0.0
      %v253 = vadd.f32 %v221, 0.0
      %v254 = vadd.f32 %v222, 0.0
      %v255 = vadd.f32 %v223, 0.0
      %v256 = vadd.f32 %v224, 0.0
      %v257 = vadd.f32 %v225, 0.0
      %v258 = vadd.f32 %v226, 0.0
      %v259 = vadd.f32 %v227, 0.0
      %v260 = vadd.f32 %v228, 0.0
      %v261 = vadd.f32 %v229, 0.0
      %v262 = vadd.f32 %v230, 0.0
      %v263 = vadd.f32 %v231, 0.0
      %v264 = vadd.f32 %v232, 0.0
      %v265 = vadd.f32 %v233, 0.0
      %v266 = vadd.f32 %v234, 0.0
      %v267 = vadd.f32 %v235, 0.0
      %v268 = vadd.f32 %v236, 0.0
      %v269 = vld [vmem:[%s165 + $0x1] sm:$0xff]
      %v270 = vld [vmem:[%s165 + $0x9] sm:$0xff]
      %v271 = vld [vmem:[%s165 + $0x19] sm:$0xff]
      %v272 = vld [vmem:[%s165 + $0x21] sm:$0xff]
      %v273 = vld [vmem:[%s165 + $0x31] sm:$0xff]
      %v274 = vld [vmem:[%s165 + $0x39] sm:$0xff]
      %v275 = vld [vmem:[%s165 + $0x49] sm:$0xff]
      %v276 = vld [vmem:[%s165 + $0x51] sm:$0xff]
      %v277 = vld [vmem:[%s165 + $0x61] sm:$0xff]
      %v278 = vld [vmem:[%s165 + $0x69] sm:$0xff]
      %v279 = vld [vmem:[%s165 + $0x79] sm:$0xff]
      %v280 = vld [vmem:[%s165 + $0x81] sm:$0xff]
      %v281 = vld [vmem:[%s165 + $0x91] sm:$0xff]
      %v282 = vld [vmem:[%s165 + $0x99] sm:$0xff]
      %v283 = vld [vmem:[%s165 + $0xa9] sm:$0xff]
      %v284 = vld [vmem:[%s165 + $0xb1] sm:$0xff]
      %v285 = vld [vmem:[%s165 + $0xc1] sm:$0xff]
      %v286 = vld [vmem:[%s165 + $0xc9] sm:$0xff]
      %v287 = vld [vmem:[%s165 + $0xd9] sm:$0xff]
      %v288 = vld [vmem:[%s165 + $0xe1] sm:$0xff]
      %v289 = vld [vmem:[%s165 + $0xf1] sm:$0xff]
      %v290 = vld [vmem:[%s165 + $0xf9] sm:$0xff]
      %v291 = vld [vmem:[%s165 + $0x109] sm:$0xff]
      %v292 = vld [vmem:[%s165 + $0x111] sm:$0xff]
      %v293 = vld [vmem:[%s165 + $0x121] sm:$0xff]
      %v294 = vld [vmem:[%s165 + $0x129] sm:$0xff]
      %v295 = vld [vmem:[%s165 + $0x139] sm:$0xff]
      %v296 = vld [vmem:[%s165 + $0x141] sm:$0xff]
      %v297 = vld [vmem:[%s165 + $0x151] sm:$0xff]
      %v298 = vld [vmem:[%s165 + $0x159] sm:$0xff]
      %v299 = vld [vmem:[%s165 + $0x169] sm:$0xff]
      %v300 = vld [vmem:[%s165 + $0x171] sm:$0xff]
      %v301 = vld [vmem:[%s1 + $0x1] sm:$0x1]
      %v302 = vperm.slane %v301, 0
      %v303 = vmul.f32 %v269, %v302
      %v304 = vmul.f32 %v270, %v302
      %v305 = vmul.f32 %v271, %v302
      %v306 = vmul.f32 %v272, %v302
      %v307 = vmul.f32 %v273, %v302
      %v308 = vmul.f32 %v274, %v302
      %v309 = vmul.f32 %v275, %v302
      %v310 = vmul.f32 %v276, %v302
      %v311 = vmul.f32 %v277, %v302
      %v312 = vmul.f32 %v278, %v302
      %v313 = vmul.f32 %v279, %v302
      %v314 = vmul.f32 %v280, %v302
      %v315 = vmul.f32 %v281, %v302
      %v316 = vmul.f32 %v282, %v302
      %v317 = vmul.f32 %v283, %v302
      %v318 = vmul.f32 %v284, %v302
      %v319 = vmul.f32 %v285, %v302
      %v320 = vmul.f32 %v286, %v302
      %v321 = vmul.f32 %v287, %v302
      %v322 = vmul.f32 %v288, %v302
      %v323 = vmul.f32 %v289, %v302
      %v324 = vmul.f32 %v290, %v302
      %v325 = vmul.f32 %v291, %v302
      %v326 = vmul.f32 %v292, %v302
      %v327 = vmul.f32 %v293, %v302
      %v328 = vmul.f32 %v294, %v302
      %v329 = vmul.f32 %v295, %v302
      %v330 = vmul.f32 %v296, %v302
      %v331 = vmul.f32 %v297, %v302
      %v332 = vmul.f32 %v298, %v302
      %v333 = vmul.f32 %v299, %v302
      %v334 = vmul.f32 %v300, %v302
      %v335 = vadd.f32 %v237, %v303
      %v336 = vadd.f32 %v238, %v304
      %v337 = vadd.f32 %v239, %v305
      %v338 = vadd.f32 %v240, %v306
      %v339 = vadd.f32 %v241, %v307
      %v340 = vadd.f32 %v242, %v308
      %v341 = vadd.f32 %v243, %v309
      %v342 = vadd.f32 %v244, %v310
      %v343 = vadd.f32 %v245, %v311
      %v344 = vadd.f32 %v246, %v312
      %v345 = vadd.f32 %v247, %v313
      %v346 = vadd.f32 %v248, %v314
      %v347 = vadd.f32 %v249, %v315
      %v348 = vadd.f32 %v250, %v316
      %v349 = vadd.f32 %v251, %v317
      %v350 = vadd.f32 %v252, %v318
      %v351 = vadd.f32 %v253, %v319
      %v352 = vadd.f32 %v254, %v320
      %v353 = vadd.f32 %v255, %v321
      %v354 = vadd.f32 %v256, %v322
      %v355 = vadd.f32 %v257, %v323
      %v356 = vadd.f32 %v258, %v324
      %v357 = vadd.f32 %v259, %v325
      %v358 = vadd.f32 %v260, %v326
      %v359 = vadd.f32 %v261, %v327
      %v360 = vadd.f32 %v262, %v328
      %v361 = vadd.f32 %v263, %v329
      %v362 = vadd.f32 %v264, %v330
      %v363 = vadd.f32 %v265, %v331
      %v364 = vadd.f32 %v266, %v332
      %v365 = vadd.f32 %v267, %v333
      %v366 = vadd.f32 %v268, %v334
      %v367 = vld [vmem:[%s165 + $0x2] sm:$0xff]
      %v368 = vld [vmem:[%s165 + $0xa] sm:$0xff]
      %v369 = vld [vmem:[%s165 + $0x1a] sm:$0xff]
      %v370 = vld [vmem:[%s165 + $0x22] sm:$0xff]
      %v371 = vld [vmem:[%s165 + $0x32] sm:$0xff]
      %v372 = vld [vmem:[%s165 + $0x3a] sm:$0xff]
      %v373 = vld [vmem:[%s165 + $0x4a] sm:$0xff]
      %v374 = vld [vmem:[%s165 + $0x52] sm:$0xff]
      %v375 = vld [vmem:[%s165 + $0x62] sm:$0xff]
      %v376 = vld [vmem:[%s165 + $0x6a] sm:$0xff]
      %v377 = vld [vmem:[%s165 + $0x7a] sm:$0xff]
      %v378 = vld [vmem:[%s165 + $0x82] sm:$0xff]
      %v379 = vld [vmem:[%s165 + $0x92] sm:$0xff]
      %v380 = vld [vmem:[%s165 + $0x9a] sm:$0xff]
      %v381 = vld [vmem:[%s165 + $0xaa] sm:$0xff]
      %v382 = vld [vmem:[%s165 + $0xb2] sm:$0xff]
      %v383 = vld [vmem:[%s165 + $0xc2] sm:$0xff]
      %v384 = vld [vmem:[%s165 + $0xca] sm:$0xff]
      %v385 = vld [vmem:[%s165 + $0xda] sm:$0xff]
      %v386 = vld [vmem:[%s165 + $0xe2] sm:$0xff]
      %v387 = vld [vmem:[%s165 + $0xf2] sm:$0xff]
      %v388 = vld [vmem:[%s165 + $0xfa] sm:$0xff]
      %v389 = vld [vmem:[%s165 + $0x10a] sm:$0xff]
      %v390 = vld [vmem:[%s165 + $0x112] sm:$0xff]
      %v391 = vld [vmem:[%s165 + $0x122] sm:$0xff]
      %v392 = vld [vmem:[%s165 + $0x12a] sm:$0xff]
      %v393 = vld [vmem:[%s165 + $0x13a] sm:$0xff]
      %v394 = vld [vmem:[%s165 + $0x142] sm:$0xff]
      %v395 = vld [vmem:[%s165 + $0x152] sm:$0xff]
      %v396 = vld [vmem:[%s165 + $0x15a] sm:$0xff]
      %v397 = vld [vmem:[%s165 + $0x16a] sm:$0xff]
      %v398 = vld [vmem:[%s165 + $0x172] sm:$0xff]
      %v399 = vld [vmem:[%s1 + $0x2] sm:$0x1]
      %v400 = vperm.slane %v399, 0
      %v401 = vmul.f32 %v367, %v400
      %v402 = vmul.f32 %v368, %v400
      %v403 = vmul.f32 %v369, %v400
      %v404 = vmul.f32 %v370, %v400
      %v405 = vmul.f32 %v371, %v400
      %v406 = vmul.f32 %v372, %v400
      %v407 = vmul.f32 %v373, %v400
      %v408 = vmul.f32 %v374, %v400
      %v409 = vmul.f32 %v375, %v400
      %v410 = vmul.f32 %v376, %v400
      %v411 = vmul.f32 %v377, %v400
      %v412 = vmul.f32 %v378, %v400
      %v413 = vmul.f32 %v379, %v400
      %v414 = vmul.f32 %v380, %v400
      %v415 = vmul.f32 %v381, %v400
      %v416 = vmul.f32 %v382, %v400
      %v417 = vmul.f32 %v383, %v400
      %v418 = vmul.f32 %v384, %v400
      %v419 = vmul.f32 %v385, %v400
      %v420 = vmul.f32 %v386, %v400
      %v421 = vmul.f32 %v387, %v400
      %v422 = vmul.f32 %v388, %v400
      %v423 = vmul.f32 %v389, %v400
      %v424 = vmul.f32 %v390, %v400
      %v425 = vmul.f32 %v391, %v400
      %v426 = vmul.f32 %v392, %v400
      %v427 = vmul.f32 %v393, %v400
      %v428 = vmul.f32 %v394, %v400
      %v429 = vmul.f32 %v395, %v400
      %v430 = vmul.f32 %v396, %v400
      %v431 = vmul.f32 %v397, %v400
      %v432 = vmul.f32 %v398, %v400
      %v433 = vadd.f32 %v335, %v401
      %v434 = vadd.f32 %v336, %v402
      %v435 = vadd.f32 %v337, %v403
      %v436 = vadd.f32 %v338, %v404
      %v437 = vadd.f32 %v339, %v405
      %v438 = vadd.f32 %v340, %v406
      %v439 = vadd.f32 %v341, %v407
      %v440 = vadd.f32 %v342, %v408
      %v441 = vadd.f32 %v343, %v409
      %v442 = vadd.f32 %v344, %v410
      %v443 = vadd.f32 %v345, %v411
      %v444 = vadd.f32 %v346, %v412
      %v445 = vadd.f32 %v347, %v413
      %v446 = vadd.f32 %v348, %v414
      %v447 = vadd.f32 %v349, %v415
      %v448 = vadd.f32 %v350, %v416
      %v449 = vadd.f32 %v351, %v417
      %v450 = vadd.f32 %v352, %v418
      %v451 = vadd.f32 %v353, %v419
      %v452 = vadd.f32 %v354, %v420
      %v453 = vadd.f32 %v355, %v421
      %v454 = vadd.f32 %v356, %v422
      %v455 = vadd.f32 %v357, %v423
      %v456 = vadd.f32 %v358, %v424
      %v457 = vadd.f32 %v359, %v425
      %v458 = vadd.f32 %v360, %v426
      %v459 = vadd.f32 %v361, %v427
      %v460 = vadd.f32 %v362, %v428
      %v461 = vadd.f32 %v363, %v429
      %v462 = vadd.f32 %v364, %v430
      %v463 = vadd.f32 %v365, %v431
      %v464 = vadd.f32 %v366, %v432
      %s465 = scalar_lea.vmem %s165, 24
      %v466 = vld [vmem:[%s465] sm:$0xff]
      %v467 = vld [vmem:[%s465 + $0x8] sm:$0xff]
      %v468 = vld [vmem:[%s465 + $0x18] sm:$0xff]
      %v469 = vld [vmem:[%s465 + $0x20] sm:$0xff]
      %v470 = vld [vmem:[%s465 + $0x30] sm:$0xff]
      %v471 = vld [vmem:[%s465 + $0x38] sm:$0xff]
      %v472 = vld [vmem:[%s465 + $0x48] sm:$0xff]
      %v473 = vld [vmem:[%s465 + $0x50] sm:$0xff]
      %v474 = vld [vmem:[%s465 + $0x60] sm:$0xff]
      %v475 = vld [vmem:[%s465 + $0x68] sm:$0xff]
      %v476 = vld [vmem:[%s465 + $0x78] sm:$0xff]
      %v477 = vld [vmem:[%s465 + $0x80] sm:$0xff]
      %v478 = vld [vmem:[%s465 + $0x90] sm:$0xff]
      %v479 = vld [vmem:[%s465 + $0x98] sm:$0xff]
      %v480 = vld [vmem:[%s465 + $0xa8] sm:$0xff]
      %v481 = vld [vmem:[%s465 + $0xb0] sm:$0xff]
      %v482 = vld [vmem:[%s465 + $0xc0] sm:$0xff]
      %v483 = vld [vmem:[%s465 + $0xc8] sm:$0xff]
      %v484 = vld [vmem:[%s465 + $0xd8] sm:$0xff]
      %v485 = vld [vmem:[%s465 + $0xe0] sm:$0xff]
      %v486 = vld [vmem:[%s465 + $0xf0] sm:$0xff]
      %v487 = vld [vmem:[%s465 + $0xf8] sm:$0xff]
      %v488 = vld [vmem:[%s465 + $0x108] sm:$0xff]
      %v489 = vld [vmem:[%s465 + $0x110] sm:$0xff]
      %v490 = vld [vmem:[%s465 + $0x120] sm:$0xff]
      %v491 = vld [vmem:[%s465 + $0x128] sm:$0xff]
      %v492 = vld [vmem:[%s465 + $0x138] sm:$0xff]
      %v493 = vld [vmem:[%s465 + $0x140] sm:$0xff]
      %v494 = vld [vmem:[%s465 + $0x150] sm:$0xff]
      %v495 = vld [vmem:[%s465 + $0x158] sm:$0xff]
      %v496 = vld [vmem:[%s465 + $0x168] sm:$0xff]
      %v497 = vld [vmem:[%s465 + $0x170] sm:$0xff]
      %v498 = vld [vmem:[%s1 + $0x3] sm:$0x1]
      %v499 = vperm.slane %v498, 0
      %v500 = vmul.f32 %v466, %v499
      %v501 = vmul.f32 %v467, %v499
      %v502 = vmul.f32 %v468, %v499
      %v503 = vmul.f32 %v469, %v499
      %v504 = vmul.f32 %v470, %v499
      %v505 = vmul.f32 %v471, %v499
      %v506 = vmul.f32 %v472, %v499
      %v507 = vmul.f32 %v473, %v499
      %v508 = vmul.f32 %v474, %v499
      %v509 = vmul.f32 %v475, %v499
      %v510 = vmul.f32 %v476, %v499
      %v511 = vmul.f32 %v477, %v499
      %v512 = vmul.f32 %v478, %v499
      %v513 = vmul.f32 %v479, %v499
      %v514 = vmul.f32 %v480, %v499
      %v515 = vmul.f32 %v481, %v499
      %v516 = vmul.f32 %v482, %v499
      %v517 = vmul.f32 %v483, %v499
      %v518 = vmul.f32 %v484, %v499
      %v519 = vmul.f32 %v485, %v499
      %v520 = vmul.f32 %v486, %v499
      %v521 = vmul.f32 %v487, %v499
      %v522 = vmul.f32 %v488, %v499
      %v523 = vmul.f32 %v489, %v499
      %v524 = vmul.f32 %v490, %v499
      %v525 = vmul.f32 %v491, %v499
      %v526 = vmul.f32 %v492, %v499
      %v527 = vmul.f32 %v493, %v499
      %v528 = vmul.f32 %v494, %v499
      %v529 = vmul.f32 %v495, %v499
      %v530 = vmul.f32 %v496, %v499
      %v531 = vmul.f32 %v497, %v499
      %v532 = vadd.f32 %v433, %v500
      %v533 = vadd.f32 %v434, %v501
      %v534 = vadd.f32 %v435, %v502
      %v535 = vadd.f32 %v436, %v503
      %v536 = vadd.f32 %v437, %v504
      %v537 = vadd.f32 %v438, %v505
      %v538 = vadd.f32 %v439, %v506
      %v539 = vadd.f32 %v440, %v507
      %v540 = vadd.f32 %v441, %v508
      %v541 = vadd.f32 %v442, %v509
      %v542 = vadd.f32 %v443, %v510
      %v543 = vadd.f32 %v444, %v511
      %v544 = vadd.f32 %v445, %v512
      %v545 = vadd.f32 %v446, %v513
      %v546 = vadd.f32 %v447, %v514
      %v547 = vadd.f32 %v448, %v515
      %v548 = vadd.f32 %v449, %v516
      %v549 = vadd.f32 %v450, %v517
      %v550 = vadd.f32 %v451, %v518
      %v551 = vadd.f32 %v452, %v519
      %v552 = vadd.f32 %v453, %v520
      %v553 = vadd.f32 %v454, %v521
      %v554 = vadd.f32 %v455, %v522
      %v555 = vadd.f32 %v456, %v523
      %v556 = vadd.f32 %v457, %v524
      %v557 = vadd.f32 %v458, %v525
      %v558 = vadd.f32 %v459, %v526
      %v559 = vadd.f32 %v460, %v527
      %v560 = vadd.f32 %v461, %v528
      %v561 = vadd.f32 %v462, %v529
      %v562 = vadd.f32 %v463, %v530
      %v563 = vadd.f32 %v464, %v531
      %v564 = vld [vmem:[%s465 + $0x1] sm:$0xff]
      %v565 = vld [vmem:[%s465 + $0x9] sm:$0xff]
      %v566 = vld [vmem:[%s465 + $0x19] sm:$0xff]
      %v567 = vld [vmem:[%s465 + $0x21] sm:$0xff]
      %v568 = vld [vmem:[%s465 + $0x31] sm:$0xff]
      %v569 = vld [vmem:[%s465 + $0x39] sm:$0xff]
      %v570 = vld [vmem:[%s465 + $0x49] sm:$0xff]
      %v571 = vld [vmem:[%s465 + $0x51] sm:$0xff]
      %v572 = vld [vmem:[%s465 + $0x61] sm:$0xff]
      %v573 = vld [vmem:[%s465 + $0x69] sm:$0xff]
      %v574 = vld [vmem:[%s465 + $0x79] sm:$0xff]
      %v575 = vld [vmem:[%s465 + $0x81] sm:$0xff]
      %v576 = vld [vmem:[%s465 + $0x91] sm:$0xff]
      %v577 = vld [vmem:[%s465 + $0x99] sm:$0xff]
      %v578 = vld [vmem:[%s465 + $0xa9] sm:$0xff]
      %v579 = vld [vmem:[%s465 + $0xb1] sm:$0xff]
      %v580 = vld [vmem:[%s465 + $0xc1] sm:$0xff]
      %v581 = vld [vmem:[%s465 + $0xc9] sm:$0xff]
      %v582 = vld [vmem:[%s465 + $0xd9] sm:$0xff]
      %v583 = vld [vmem:[%s465 + $0xe1] sm:$0xff]
      %v584 = vld [vmem:[%s465 + $0xf1] sm:$0xff]
      %v585 = vld [vmem:[%s465 + $0xf9] sm:$0xff]
      %v586 = vld [vmem:[%s465 + $0x109] sm:$0xff]
      %v587 = vld [vmem:[%s465 + $0x111] sm:$0xff]
      %v588 = vld [vmem:[%s465 + $0x121] sm:$0xff]
      %v589 = vld [vmem:[%s465 + $0x129] sm:$0xff]
      %v590 = vld [vmem:[%s465 + $0x139] sm:$0xff]
      %v591 = vld [vmem:[%s465 + $0x141] sm:$0xff]
      %v592 = vld [vmem:[%s465 + $0x151] sm:$0xff]
      %v593 = vld [vmem:[%s465 + $0x159] sm:$0xff]
      %v594 = vld [vmem:[%s465 + $0x169] sm:$0xff]
      %v595 = vld [vmem:[%s465 + $0x171] sm:$0xff]
      %v596 = vld [vmem:[%s1 + $0x4] sm:$0x1]
      %v597 = vperm.slane %v596, 0
      %v598 = vmul.f32 %v564, %v597
      %v599 = vmul.f32 %v565, %v597
      %v600 = vmul.f32 %v566, %v597
      %v601 = vmul.f32 %v567, %v597
      %v602 = vmul.f32 %v568, %v597
      %v603 = vmul.f32 %v569, %v597
      %v604 = vmul.f32 %v570, %v597
      %v605 = vmul.f32 %v571, %v597
      %v606 = vmul.f32 %v572, %v597
      %v607 = vmul.f32 %v573, %v597
      %v608 = vmul.f32 %v574, %v597
      %v609 = vmul.f32 %v575, %v597
      %v610 = vmul.f32 %v576, %v597
      %v611 = vmul.f32 %v577, %v597
      %v612 = vmul.f32 %v578, %v597
      %v613 = vmul.f32 %v579, %v597
      %v614 = vmul.f32 %v580, %v597
      %v615 = vmul.f32 %v581, %v597
      %v616 = vmul.f32 %v582, %v597
      %v617 = vmul.f32 %v583, %v597
      %v618 = vmul.f32 %v584, %v597
      %v619 = vmul.f32 %v585, %v597
      %v620 = vmul.f32 %v586, %v597
      %v621 = vmul.f32 %v587, %v597
      %v622 = vmul.f32 %v588, %v597
      %v623 = vmul.f32 %v589, %v597
      %v624 = vmul.f32 %v590, %v597
      %v625 = vmul.f32 %v591, %v597
      %v626 = vmul.f32 %v592, %v597
      %v627 = vmul.f32 %v593, %v597
      %v628 = vmul.f32 %v594, %v597
      %v629 = vmul.f32 %v595, %v597
      %v630 = vadd.f32 %v532, %v598
      %v631 = vadd.f32 %v533, %v599
      %v632 = vadd.f32 %v534, %v600
      %v633 = vadd.f32 %v535, %v601
      %v634 = vadd.f32 %v536, %v602
      %v635 = vadd.f32 %v537, %v603
      %v636 = vadd.f32 %v538, %v604
      %v637 = vadd.f32 %v539, %v605
      %v638 = vadd.f32 %v540, %v606
      %v639 = vadd.f32 %v541, %v607
      %v640 = vadd.f32 %v542, %v608
      %v641 = vadd.f32 %v543, %v609
      %v642 = vadd.f32 %v544, %v610
      %v643 = vadd.f32 %v545, %v611
      %v644 = vadd.f32 %v546, %v612
      %v645 = vadd.f32 %v547, %v613
      %v646 = vadd.f32 %v548, %v614
      %v647 = vadd.f32 %v549, %v615
      %v648 = vadd.f32 %v550, %v616
      %v649 = vadd.f32 %v551, %v617
      %v650 = vadd.f32 %v552, %v618
      %v651 = vadd.f32 %v553, %v619
      %v652 = vadd.f32 %v554, %v620
      %v653 = vadd.f32 %v555, %v621
      %v654 = vadd.f32 %v556, %v622
      %v655 = vadd.f32 %v557, %v623
      %v656 = vadd.f32 %v558, %v624
      %v657 = vadd.f32 %v559, %v625
      %v658 = vadd.f32 %v560, %v626
      %v659 = vadd.f32 %v561, %v627
      %v660 = vadd.f32 %v562, %v628
      %v661 = vadd.f32 %v563, %v629
      %v662 = vld [vmem:[%s465 + $0x2] sm:$0xff]
      %v663 = vld [vmem:[%s465 + $0xa] sm:$0xff]
      %v664 = vld [vmem:[%s465 + $0x1a] sm:$0xff]
      %v665 = vld [vmem:[%s465 + $0x22] sm:$0xff]
      %v666 = vld [vmem:[%s465 + $0x32] sm:$0xff]
      %v667 = vld [vmem:[%s465 + $0x3a] sm:$0xff]
      %v668 = vld [vmem:[%s465 + $0x4a] sm:$0xff]
      %v669 = vld [vmem:[%s465 + $0x52] sm:$0xff]
      %v670 = vld [vmem:[%s465 + $0x62] sm:$0xff]
      %v671 = vld [vmem:[%s465 + $0x6a] sm:$0xff]
      %v672 = vld [vmem:[%s465 + $0x7a] sm:$0xff]
      %v673 = vld [vmem:[%s465 + $0x82] sm:$0xff]
      %v674 = vld [vmem:[%s465 + $0x92] sm:$0xff]
      %v675 = vld [vmem:[%s465 + $0x9a] sm:$0xff]
      %v676 = vld [vmem:[%s465 + $0xaa] sm:$0xff]
      %v677 = vld [vmem:[%s465 + $0xb2] sm:$0xff]
      %v678 = vld [vmem:[%s465 + $0xc2] sm:$0xff]
      %v679 = vld [vmem:[%s465 + $0xca] sm:$0xff]
      %v680 = vld [vmem:[%s465 + $0xda] sm:$0xff]
      %v681 = vld [vmem:[%s465 + $0xe2] sm:$0xff]
      %v682 = vld [vmem:[%s465 + $0xf2] sm:$0xff]
      %v683 = vld [vmem:[%s465 + $0xfa] sm:$0xff]
      %v684 = vld [vmem:[%s465 + $0x10a] sm:$0xff]
      %v685 = vld [vmem:[%s465 + $0x112] sm:$0xff]
      %v686 = vld [vmem:[%s465 + $0x122] sm:$0xff]
      %v687 = vld [vmem:[%s465 + $0x12a] sm:$0xff]
      %v688 = vld [vmem:[%s465 + $0x13a] sm:$0xff]
      %v689 = vld [vmem:[%s465 + $0x142] sm:$0xff]
      %v690 = vld [vmem:[%s465 + $0x152] sm:$0xff]
      %v691 = vld [vmem:[%s465 + $0x15a] sm:$0xff]
      %v692 = vld [vmem:[%s465 + $0x16a] sm:$0xff]
      %v693 = vld [vmem:[%s465 + $0x172] sm:$0xff]
      %v694 = vld [vmem:[%s1 + $0x5] sm:$0x1]
      %v695 = vperm.slane %v694, 0
      %v696 = vmul.f32 %v662, %v695
      %v697 = vmul.f32 %v663, %v695
      %v698 = vmul.f32 %v664, %v695
      %v699 = vmul.f32 %v665, %v695
      %v700 = vmul.f32 %v666, %v695
      %v701 = vmul.f32 %v667, %v695
      %v702 = vmul.f32 %v668, %v695
      %v703 = vmul.f32 %v669, %v695
      %v704 = vmul.f32 %v670, %v695
      %v705 = vmul.f32 %v671, %v695
      %v706 = vmul.f32 %v672, %v695
      %v707 = vmul.f32 %v673, %v695
      %v708 = vmul.f32 %v674, %v695
      %v709 = vmul.f32 %v675, %v695
      %v710 = vmul.f32 %v676, %v695
      %v711 = vmul.f32 %v677, %v695
      %v712 = vmul.f32 %v678, %v695
      %v713 = vmul.f32 %v679, %v695
      %v714 = vmul.f32 %v680, %v695
      %v715 = vmul.f32 %v681, %v695
      %v716 = vmul.f32 %v682, %v695
      %v717 = vmul.f32 %v683, %v695
      %v718 = vmul.f32 %v684, %v695
      %v719 = vmul.f32 %v685, %v695
      %v720 = vmul.f32 %v686, %v695
      %v721 = vmul.f32 %v687, %v695
      %v722 = vmul.f32 %v688, %v695
      %v723 = vmul.f32 %v689, %v695
      %v724 = vmul.f32 %v690, %v695
      %v725 = vmul.f32 %v691, %v695
      %v726 = vmul.f32 %v692, %v695
      %v727 = vmul.f32 %v693, %v695
      %v728 = vadd.f32 %v630, %v696
      %v729 = vadd.f32 %v631, %v697
      %v730 = vadd.f32 %v632, %v698
      %v731 = vadd.f32 %v633, %v699
      %v732 = vadd.f32 %v634, %v700
      %v733 = vadd.f32 %v635, %v701
      %v734 = vadd.f32 %v636, %v702
      %v735 = vadd.f32 %v637, %v703
      %v736 = vadd.f32 %v638, %v704
      %v737 = vadd.f32 %v639, %v705
      %v738 = vadd.f32 %v640, %v706
      %v739 = vadd.f32 %v641, %v707
      %v740 = vadd.f32 %v642, %v708
      %v741 = vadd.f32 %v643, %v709
      %v742 = vadd.f32 %v644, %v710
      %v743 = vadd.f32 %v645, %v711
      %v744 = vadd.f32 %v646, %v712
      %v745 = vadd.f32 %v647, %v713
      %v746 = vadd.f32 %v648, %v714
      %v747 = vadd.f32 %v649, %v715
      %v748 = vadd.f32 %v650, %v716
      %v749 = vadd.f32 %v651, %v717
      %v750 = vadd.f32 %v652, %v718
      %v751 = vadd.f32 %v653, %v719
      %v752 = vadd.f32 %v654, %v720
      %v753 = vadd.f32 %v655, %v721
      %v754 = vadd.f32 %v656, %v722
      %v755 = vadd.f32 %v657, %v723
      %v756 = vadd.f32 %v658, %v724
      %v757 = vadd.f32 %v659, %v725
      %v758 = vadd.f32 %v660, %v726
      %v759 = vadd.f32 %v661, %v727
      %s760 = scalar_lea.vmem %s165, 48
      %v761 = vld [vmem:[%s760] sm:$0xff]
      %v762 = vld [vmem:[%s760 + $0x8] sm:$0xff]
      %v763 = vld [vmem:[%s760 + $0x18] sm:$0xff]
      %v764 = vld [vmem:[%s760 + $0x20] sm:$0xff]
      %v765 = vld [vmem:[%s760 + $0x30] sm:$0xff]
      %v766 = vld [vmem:[%s760 + $0x38] sm:$0xff]
      %v767 = vld [vmem:[%s760 + $0x48] sm:$0xff]
      %v768 = vld [vmem:[%s760 + $0x50] sm:$0xff]
      %v769 = vld [vmem:[%s760 + $0x60] sm:$0xff]
      %v770 = vld [vmem:[%s760 + $0x68] sm:$0xff]
      %v771 = vld [vmem:[%s760 + $0x78] sm:$0xff]
      %v772 = vld [vmem:[%s760 + $0x80] sm:$0xff]
      %v773 = vld [vmem:[%s760 + $0x90] sm:$0xff]
      %v774 = vld [vmem:[%s760 + $0x98] sm:$0xff]
      %v775 = vld [vmem:[%s760 + $0xa8] sm:$0xff]
      %v776 = vld [vmem:[%s760 + $0xb0] sm:$0xff]
      %v777 = vld [vmem:[%s760 + $0xc0] sm:$0xff]
      %v778 = vld [vmem:[%s760 + $0xc8] sm:$0xff]
      %v779 = vld [vmem:[%s760 + $0xd8] sm:$0xff]
      %v780 = vld [vmem:[%s760 + $0xe0] sm:$0xff]
      %v781 = vld [vmem:[%s760 + $0xf0] sm:$0xff]
      %v782 = vld [vmem:[%s760 + $0xf8] sm:$0xff]
      %v783 = vld [vmem:[%s760 + $0x108] sm:$0xff]
      %v784 = vld [vmem:[%s760 + $0x110] sm:$0xff]
      %v785 = vld [vmem:[%s760 + $0x120] sm:$0xff]
      %v786 = vld [vmem:[%s760 + $0x128] sm:$0xff]
      %v787 = vld [vmem:[%s760 + $0x138] sm:$0xff]
      %v788 = vld [vmem:[%s760 + $0x140] sm:$0xff]
      %v789 = vld [vmem:[%s760 + $0x150] sm:$0xff]
      %v790 = vld [vmem:[%s760 + $0x158] sm:$0xff]
      %v791 = vld [vmem:[%s760 + $0x168] sm:$0xff]
      %v792 = vld [vmem:[%s760 + $0x170] sm:$0xff]
      %v793 = vld [vmem:[%s1 + $0x6] sm:$0x1]
      %v794 = vperm.slane %v793, 0
      %v795 = vmul.f32 %v761, %v794
      %v796 = vmul.f32 %v762, %v794
      %v797 = vmul.f32 %v763, %v794
      %v798 = vmul.f32 %v764, %v794
      %v799 = vmul.f32 %v765, %v794
      %v800 = vmul.f32 %v766, %v794
      %v801 = vmul.f32 %v767, %v794
      %v802 = vmul.f32 %v768, %v794
      %v803 = vmul.f32 %v769, %v794
      %v804 = vmul.f32 %v770, %v794
      %v805 = vmul.f32 %v771, %v794
      %v806 = vmul.f32 %v772, %v794
      %v807 = vmul.f32 %v773, %v794
      %v808 = vmul.f32 %v774, %v794
      %v809 = vmul.f32 %v775, %v794
      %v810 = vmul.f32 %v776, %v794
      %v811 = vmul.f32 %v777, %v794
      %v812 = vmul.f32 %v778, %v794
      %v813 = vmul.f32 %v779, %v794
      %v814 = vmul.f32 %v780, %v794
      %v815 = vmul.f32 %v781, %v794
      %v816 = vmul.f32 %v782, %v794
      %v817 = vmul.f32 %v783, %v794
      %v818 = vmul.f32 %v784, %v794
      %v819 = vmul.f32 %v785, %v794
      %v820 = vmul.f32 %v786, %v794
      %v821 = vmul.f32 %v787, %v794
      %v822 = vmul.f32 %v788, %v794
      %v823 = vmul.f32 %v789, %v794
      %v824 = vmul.f32 %v790, %v794
      %v825 = vmul.f32 %v791, %v794
      %v826 = vmul.f32 %v792, %v794
      %v827 = vadd.f32 %v728, %v795
      %v828 = vadd.f32 %v729, %v796
      %v829 = vadd.f32 %v730, %v797
      %v830 = vadd.f32 %v731, %v798
      %v831 = vadd.f32 %v732, %v799
      %v832 = vadd.f32 %v733, %v800
      %v833 = vadd.f32 %v734, %v801
      %v834 = vadd.f32 %v735, %v802
      %v835 = vadd.f32 %v736, %v803
      %v836 = vadd.f32 %v737, %v804
      %v837 = vadd.f32 %v738, %v805
      %v838 = vadd.f32 %v739, %v806
      %v839 = vadd.f32 %v740, %v807
      %v840 = vadd.f32 %v741, %v808
      %v841 = vadd.f32 %v742, %v809
      %v842 = vadd.f32 %v743, %v810
      %v843 = vadd.f32 %v744, %v811
      %v844 = vadd.f32 %v745, %v812
      %v845 = vadd.f32 %v746, %v813
      %v846 = vadd.f32 %v747, %v814
      %v847 = vadd.f32 %v748, %v815
      %v848 = vadd.f32 %v749, %v816
      %v849 = vadd.f32 %v750, %v817
      %v850 = vadd.f32 %v751, %v818
      %v851 = vadd.f32 %v752, %v819
      %v852 = vadd.f32 %v753, %v820
      %v853 = vadd.f32 %v754, %v821
      %v854 = vadd.f32 %v755, %v822
      %v855 = vadd.f32 %v756, %v823
      %v856 = vadd.f32 %v757, %v824
      %v857 = vadd.f32 %v758, %v825
      %v858 = vadd.f32 %v759, %v826
      %v859 = vld [vmem:[%s760 + $0x1] sm:$0xff]
      %v860 = vld [vmem:[%s760 + $0x9] sm:$0xff]
      %v861 = vld [vmem:[%s760 + $0x19] sm:$0xff]
      %v862 = vld [vmem:[%s760 + $0x21] sm:$0xff]
      %v863 = vld [vmem:[%s760 + $0x31] sm:$0xff]
      %v864 = vld [vmem:[%s760 + $0x39] sm:$0xff]
      %v865 = vld [vmem:[%s760 + $0x49] sm:$0xff]
      %v866 = vld [vmem:[%s760 + $0x51] sm:$0xff]
      %v867 = vld [vmem:[%s760 + $0x61] sm:$0xff]
      %v868 = vld [vmem:[%s760 + $0x69] sm:$0xff]
      %v869 = vld [vmem:[%s760 + $0x79] sm:$0xff]
      %v870 = vld [vmem:[%s760 + $0x81] sm:$0xff]
      %v871 = vld [vmem:[%s760 + $0x91] sm:$0xff]
      %v872 = vld [vmem:[%s760 + $0x99] sm:$0xff]
      %v873 = vld [vmem:[%s760 + $0xa9] sm:$0xff]
      %v874 = vld [vmem:[%s760 + $0xb1] sm:$0xff]
      %v875 = vld [vmem:[%s760 + $0xc1] sm:$0xff]
      %v876 = vld [vmem:[%s760 + $0xc9] sm:$0xff]
      %v877 = vld [vmem:[%s760 + $0xd9] sm:$0xff]
      %v878 = vld [vmem:[%s760 + $0xe1] sm:$0xff]
      %v879 = vld [vmem:[%s760 + $0xf1] sm:$0xff]
      %v880 = vld [vmem:[%s760 + $0xf9] sm:$0xff]
      %v881 = vld [vmem:[%s760 + $0x109] sm:$0xff]
      %v882 = vld [vmem:[%s760 + $0x111] sm:$0xff]
      %v883 = vld [vmem:[%s760 + $0x121] sm:$0xff]
      %v884 = vld [vmem:[%s760 + $0x129] sm:$0xff]
      %v885 = vld [vmem:[%s760 + $0x139] sm:$0xff]
      %v886 = vld [vmem:[%s760 + $0x141] sm:$0xff]
      %v887 = vld [vmem:[%s760 + $0x151] sm:$0xff]
      %v888 = vld [vmem:[%s760 + $0x159] sm:$0xff]
      %v889 = vld [vmem:[%s760 + $0x169] sm:$0xff]
      %v890 = vld [vmem:[%s760 + $0x171] sm:$0xff]
      %v891 = vld [vmem:[%s1 + $0x7] sm:$0x1]
      %v892 = vperm.slane %v891, 0
      %v893 = vmul.f32 %v859, %v892
      %v894 = vmul.f32 %v860, %v892
      %v895 = vmul.f32 %v861, %v892
      %v896 = vmul.f32 %v862, %v892
      %v897 = vmul.f32 %v863, %v892
      %v898 = vmul.f32 %v864, %v892
      %v899 = vmul.f32 %v865, %v892
      %v900 = vmul.f32 %v866, %v892
      %v901 = vmul.f32 %v867, %v892
      %v902 = vmul.f32 %v868, %v892
      %v903 = vmul.f32 %v869, %v892
      %v904 = vmul.f32 %v870, %v892
      %v905 = vmul.f32 %v871, %v892
      %v906 = vmul.f32 %v872, %v892
      %v907 = vmul.f32 %v873, %v892
      %v908 = vmul.f32 %v874, %v892
      %v909 = vmul.f32 %v875, %v892
      %v910 = vmul.f32 %v876, %v892
      %v911 = vmul.f32 %v877, %v892
      %v912 = vmul.f32 %v878, %v892
      %v913 = vmul.f32 %v879, %v892
      %v914 = vmul.f32 %v880, %v892
      %v915 = vmul.f32 %v881, %v892
      %v916 = vmul.f32 %v882, %v892
      %v917 = vmul.f32 %v883, %v892
      %v918 = vmul.f32 %v884, %v892
      %v919 = vmul.f32 %v885, %v892
      %v920 = vmul.f32 %v886, %v892
      %v921 = vmul.f32 %v887, %v892
      %v922 = vmul.f32 %v888, %v892
      %v923 = vmul.f32 %v889, %v892
      %v924 = vmul.f32 %v890, %v892
      %v925 = vadd.f32 %v827, %v893
      %v926 = vadd.f32 %v828, %v894
      %v927 = vadd.f32 %v829, %v895
      %v928 = vadd.f32 %v830, %v896
      %v929 = vadd.f32 %v831, %v897
      %v930 = vadd.f32 %v832, %v898
      %v931 = vadd.f32 %v833, %v899
      %v932 = vadd.f32 %v834, %v900
      %v933 = vadd.f32 %v835, %v901
      %v934 = vadd.f32 %v836, %v902
      %v935 = vadd.f32 %v837, %v903
      %v936 = vadd.f32 %v838, %v904
      %v937 = vadd.f32 %v839, %v905
      %v938 = vadd.f32 %v840, %v906
      %v939 = vadd.f32 %v841, %v907
      %v940 = vadd.f32 %v842, %v908
      %v941 = vadd.f32 %v843, %v909
      %v942 = vadd.f32 %v844, %v910
      %v943 = vadd.f32 %v845, %v911
      %v944 = vadd.f32 %v846, %v912
      %v945 = vadd.f32 %v847, %v913
      %v946 = vadd.f32 %v848, %v914
      %v947 = vadd.f32 %v849, %v915
      %v948 = vadd.f32 %v850, %v916
      %v949 = vadd.f32 %v851, %v917
      %v950 = vadd.f32 %v852, %v918
      %v951 = vadd.f32 %v853, %v919
      %v952 = vadd.f32 %v854, %v920
      %v953 = vadd.f32 %v855, %v921
      %v954 = vadd.f32 %v856, %v922
      %v955 = vadd.f32 %v857, %v923
      %v956 = vadd.f32 %v858, %v924
      %v957 = vld [vmem:[%s760 + $0x2] sm:$0xff]
      %v958 = vld [vmem:[%s760 + $0xa] sm:$0xff]
      %v959 = vld [vmem:[%s760 + $0x1a] sm:$0xff]
      %v960 = vld [vmem:[%s760 + $0x22] sm:$0xff]
      %v961 = vld [vmem:[%s760 + $0x32] sm:$0xff]
      %v962 = vld [vmem:[%s760 + $0x3a] sm:$0xff]
      %v963 = vld [vmem:[%s760 + $0x4a] sm:$0xff]
      %v964 = vld [vmem:[%s760 + $0x52] sm:$0xff]
      %v965 = vld [vmem:[%s760 + $0x62] sm:$0xff]
      %v966 = vld [vmem:[%s760 + $0x6a] sm:$0xff]
      %v967 = vld [vmem:[%s760 + $0x7a] sm:$0xff]
      %v968 = vld [vmem:[%s760 + $0x82] sm:$0xff]
      %v969 = vld [vmem:[%s760 + $0x92] sm:$0xff]
      %v970 = vld [vmem:[%s760 + $0x9a] sm:$0xff]
      %v971 = vld [vmem:[%s760 + $0xaa] sm:$0xff]
      %v972 = vld [vmem:[%s760 + $0xb2] sm:$0xff]
      %v973 = vld [vmem:[%s760 + $0xc2] sm:$0xff]
      %v974 = vld [vmem:[%s760 + $0xca] sm:$0xff]
      %v975 = vld [vmem:[%s760 + $0xda] sm:$0xff]
      %v976 = vld [vmem:[%s760 + $0xe2] sm:$0xff]
      %v977 = vld [vmem:[%s760 + $0xf2] sm:$0xff]
      %v978 = vld [vmem:[%s760 + $0xfa] sm:$0xff]
      %v979 = vld [vmem:[%s760 + $0x10a] sm:$0xff]
      %v980 = vld [vmem:[%s760 + $0x112] sm:$0xff]
      %v981 = vld [vmem:[%s760 + $0x122] sm:$0xff]
      %v982 = vld [vmem:[%s760 + $0x12a] sm:$0xff]
      %v983 = vld [vmem:[%s760 + $0x13a] sm:$0xff]
      %v984 = vld [vmem:[%s760 + $0x142] sm:$0xff]
      %v985 = vld [vmem:[%s760 + $0x152] sm:$0xff]
      %v986 = vld [vmem:[%s760 + $0x15a] sm:$0xff]
      %v987 = vld [vmem:[%s760 + $0x16a] sm:$0xff]
      %v988 = vld [vmem:[%s760 + $0x172] sm:$0xff]
      %v989 = vld [vmem:[%s1 + $0x8] sm:$0x1]
      %v990 = vperm.slane %v989, 0
      %v991 = vmul.f32 %v957, %v990
      %v992 = vmul.f32 %v958, %v990
      %v993 = vmul.f32 %v959, %v990
      %v994 = vmul.f32 %v960, %v990
      %v995 = vmul.f32 %v961, %v990
      %v996 = vmul.f32 %v962, %v990
      %v997 = vmul.f32 %v963, %v990
      %v998 = vmul.f32 %v964, %v990
      %v999 = vmul.f32 %v965, %v990
      %v1000 = vmul.f32 %v966, %v990
      %v1001 = vmul.f32 %v967, %v990
      %v1002 = vmul.f32 %v968, %v990
      %v1003 = vmul.f32 %v969, %v990
      %v1004 = vmul.f32 %v970, %v990
      %v1005 = vmul.f32 %v971, %v990
      %v1006 = vmul.f32 %v972, %v990
      %v1007 = vmul.f32 %v973, %v990
      %v1008 = vmul.f32 %v974, %v990
      %v1009 = vmul.f32 %v975, %v990
      %v1010 = vmul.f32 %v976, %v990
      %v1011 = vmul.f32 %v977, %v990
      %v1012 = vmul.f32 %v978, %v990
      %v1013 = vmul.f32 %v979, %v990
      %v1014 = vmul.f32 %v980, %v990
      %v1015 = vmul.f32 %v981, %v990
      %v1016 = vmul.f32 %v982, %v990
      %v1017 = vmul.f32 %v983, %v990
      %v1018 = vmul.f32 %v984, %v990
      %v1019 = vmul.f32 %v985, %v990
      %v1020 = vmul.f32 %v986, %v990
      %v1021 = vmul.f32 %v987, %v990
      %v1022 = vmul.f32 %v988, %v990
      %v1023 = vadd.f32 %v925, %v991
      %v1024 = vadd.f32 %v926, %v992
      %v1025 = vadd.f32 %v927, %v993
      %v1026 = vadd.f32 %v928, %v994
      %v1027 = vadd.f32 %v929, %v995
      %v1028 = vadd.f32 %v930, %v996
      %v1029 = vadd.f32 %v931, %v997
      %v1030 = vadd.f32 %v932, %v998
      %v1031 = vadd.f32 %v933, %v999
      %v1032 = vadd.f32 %v934, %v1000
      %v1033 = vadd.f32 %v935, %v1001
      %v1034 = vadd.f32 %v936, %v1002
      %v1035 = vadd.f32 %v937, %v1003
      %v1036 = vadd.f32 %v938, %v1004
      %v1037 = vadd.f32 %v939, %v1005
      %v1038 = vadd.f32 %v940, %v1006
      %v1039 = vadd.f32 %v941, %v1007
      %v1040 = vadd.f32 %v942, %v1008
      %v1041 = vadd.f32 %v943, %v1009
      %v1042 = vadd.f32 %v944, %v1010
      %v1043 = vadd.f32 %v945, %v1011
      %v1044 = vadd.f32 %v946, %v1012
      %v1045 = vadd.f32 %v947, %v1013
      %v1046 = vadd.f32 %v948, %v1014
      %v1047 = vadd.f32 %v949, %v1015
      %v1048 = vadd.f32 %v950, %v1016
      %v1049 = vadd.f32 %v951, %v1017
      %v1050 = vadd.f32 %v952, %v1018
      %v1051 = vadd.f32 %v953, %v1019
      %v1052 = vadd.f32 %v954, %v1020
      %v1053 = vadd.f32 %v955, %v1021
      %v1054 = vadd.f32 %v956, %v1022
      %v1055 = vld [vmem:[%s2] sm:$0x1]
      %v1057 = vperm.slane %v1055, 0
      %v1059 = vadd.f32 %v1023, %v1057
      %v1060 = vadd.f32 %v1024, %v1057
      %v1061 = vadd.f32 %v1025, %v1057
      %v1062 = vadd.f32 %v1026, %v1057
      %v1063 = vadd.f32 %v1027, %v1057
      %v1064 = vadd.f32 %v1028, %v1057
      %v1065 = vadd.f32 %v1029, %v1057
      %v1066 = vadd.f32 %v1030, %v1057
      %v1067 = vadd.f32 %v1031, %v1057
      %v1068 = vadd.f32 %v1032, %v1057
      %v1069 = vadd.f32 %v1033, %v1057
      %v1070 = vadd.f32 %v1034, %v1057
      %v1071 = vadd.f32 %v1035, %v1057
      %v1072 = vadd.f32 %v1036, %v1057
      %v1073 = vadd.f32 %v1037, %v1057
      %v1074 = vadd.f32 %v1038, %v1057
      %v1075 = vadd.f32 %v1039, %v1057
      %v1076 = vadd.f32 %v1040, %v1057
      %v1077 = vadd.f32 %v1041, %v1057
      %v1078 = vadd.f32 %v1042, %v1057
      %v1079 = vadd.f32 %v1043, %v1057
      %v1080 = vadd.f32 %v1044, %v1057
      %v1081 = vadd.f32 %v1045, %v1057
      %v1082 = vadd.f32 %v1046, %v1057
      %v1083 = vadd.f32 %v1047, %v1057
      %v1084 = vadd.f32 %v1048, %v1057
      %v1085 = vadd.f32 %v1049, %v1057
      %v1086 = vadd.f32 %v1050, %v1057
      %v1087 = vadd.f32 %v1051, %v1057
      %v1088 = vadd.f32 %v1052, %v1057
      %v1089 = vadd.f32 %v1053, %v1057
      %v1090 = vadd.f32 %v1054, %v1057
      %1091 = vst [vmem:[%s170] sm:$0xff] %v1059
      %1092 = vst [vmem:[%s170 + $0x8] sm:$0xff] %v1060
      %1093 = vst [vmem:[%s170 + $0x10] sm:$0xff] %v1061
      %1094 = vst [vmem:[%s170 + $0x18] sm:$0xff] %v1062
      %1095 = vst [vmem:[%s170 + $0x20] sm:$0xff] %v1063
      %1096 = vst [vmem:[%s170 + $0x28] sm:$0xff] %v1064
      %1097 = vst [vmem:[%s170 + $0x30] sm:$0xff] %v1065
      %1098 = vst [vmem:[%s170 + $0x38] sm:$0xff] %v1066
      %1099 = vst [vmem:[%s170 + $0x40] sm:$0xff] %v1067
      %1100 = vst [vmem:[%s170 + $0x48] sm:$0xff] %v1068
      %1101 = vst [vmem:[%s170 + $0x50] sm:$0xff] %v1069
      %1102 = vst [vmem:[%s170 + $0x58] sm:$0xff] %v1070
      %1103 = vst [vmem:[%s170 + $0x60] sm:$0xff] %v1071
      %1104 = vst [vmem:[%s170 + $0x68] sm:$0xff] %v1072
      %1105 = vst [vmem:[%s170 + $0x70] sm:$0xff] %v1073
      %1106 = vst [vmem:[%s170 + $0x78] sm:$0xff] %v1074
      %1107 = vst [vmem:[%s170 + $0x80] sm:$0xff] %v1075
      %1108 = vst [vmem:[%s170 + $0x88] sm:$0xff] %v1076
      %1109 = vst [vmem:[%s170 + $0x90] sm:$0xff] %v1077
      %1110 = vst [vmem:[%s170 + $0x98] sm:$0xff] %v1078
      %1111 = vst [vmem:[%s170 + $0xa0] sm:$0xff] %v1079
      %1112 = vst [vmem:[%s170 + $0xa8] sm:$0xff] %v1080
      %1113 = vst [vmem:[%s170 + $0xb0] sm:$0xff] %v1081
      %1114 = vst [vmem:[%s170 + $0xb8] sm:$0xff] %v1082
      %1115 = vst [vmem:[%s170 + $0xc0] sm:$0xff] %v1083
      %1116 = vst [vmem:[%s170 + $0xc8] sm:$0xff] %v1084
      %1117 = vst [vmem:[%s170 + $0xd0] sm:$0xff] %v1085
      %1118 = vst [vmem:[%s170 + $0xd8] sm:$0xff] %v1086
      %1119 = vst [vmem:[%s170 + $0xe0] sm:$0xff] %v1087
      %1120 = vst [vmem:[%s170 + $0xe8] sm:$0xff] %v1088
      %1121 = vst [vmem:[%s170 + $0xf0] sm:$0xff] %v1089
      %1122 = vst [vmem:[%s170 + $0xf8] sm:$0xff] %v1090
      %p1123 = scmp.lt.s32.totalorder %s14, 1
      %s1124 = scalar_select %p1123, %s14, 1
      %s1125 = smul.addr %s1124, 32
      %s1126 = smul.addr %s1125, 8
      %s1127 = scalar_lea.vmem %s3, %s1126
      // Predicated region
      $region33: #{shuffle_block_forward.4} parent=31 // pred_check
        %p1128 = pneg %p100
      $region34: #{shuffle_block_forward.4} parent=31 // pred_check_branch
        %1130 = sbr.rel (%p1128) target = $region36
      $region35: #{shuffle_block_forward.4} parent=31 // pred_region
        _
      $region36: #{shuffle_block_forward.4} parent=31 // pred_fallthru
        _
    $region32: #{shuffle_block_forward.4} parent=5 // pred_fallthru
      _
    %p1131 = scmp.le.s32.totalorder 2, %s9
    // Predicated region
    $region37: #{shuffle_block_forward.4} parent=5 // pred_check
      %p1132 = pneg %p1131
    $region38: #{shuffle_block_forward.4} parent=5 // pred_check_branch
      %1134 = sbr.rel (%p1132) target = $region40
    $region39: #{shuffle_block_forward.4} parent=5 // pred_region
      %s1135 = ssub.s32 %s9, 2
      // Predicated region
      $region41: #{shuffle_block_forward.4} parent=39 // pred_check
        %p1136 = pneg %p106
      $region42: #{shuffle_block_forward.4} parent=39 // pred_check_branch
        %1138 = sbr.rel (%p1136) target = $region44
      $region43: #{shuffle_block_forward.4} parent=39 // pred_region
        %p1139 = scmp.lt.s32.totalorder %s15, 1
        %s1140 = scalar_select %p1139, %s15, 1
        %s1141 = smul.addr %s1140, 32
        %s1142 = smul.addr %s1141, 8
        %s1143 = scalar_lea.vmem %s3, %s1142
      $region44: #{shuffle_block_forward.4} parent=39 // pred_fallthru
        _
    $region40: #{shuffle_block_forward.4} parent=5 // pred_fallthru
      _
  $region6: #{shuffle_block_forward.4} parent=0 // loop_footer
    %s13 = sadd.s32 1, %s9
  $region7: #{shuffle_block_forward.4} parent=0 // loop_footer_branch
    %8 = sbr.rel target = $region3
  $region8: #{shuffle_block_forward.4} parent=0 // loop_exit
    _

</llo_original>
